<compile_context>
chip_gen: v7x
topology: tpu7x:2x2x1
jax: 0.10.0
libtpu: 0.0.40
codegen_flags: <defaults>
</compile_context>

<pallas_src>
import functools

import jax
import jax.numpy as jnp
from jax.experimental import pallas as pl
from jax.experimental.pallas import tpu as pltpu


# -----------------------------------------------------------------------------
# Single fused kernel:
#   acc  = sum_k  x[:, k-tile] @ W2[k-tile, :]          (bf16 inputs, f32 acc)
#   h    = relu( acc * bn_scale + bn_bias )             (on last K step)
#   out  = h @ W3 + b3                                  (on last K step)
# grid = (K // TK,)  -- reduction axis; (B,512) accumulator lives in VMEM.
# -----------------------------------------------------------------------------
def _classifier_kernel(x_ref, w2_ref, scale_ref, bias_ref, w3_ref, b3_ref,
                       o_ref, acc_ref):
    k = pl.program_id(0)

    @pl.when(k == 0)
    def _():
        acc_ref[...] = jnp.zeros_like(acc_ref)

    acc_ref[...] += jnp.dot(
        x_ref[...], w2_ref[...], preferred_element_type=jnp.float32
    )

    @pl.when(k == pl.num_programs(0) - 1)
    def _():
        # Eval-mode BN folded into per-feature affine, then ReLU (all f32).
        h = jnp.maximum(acc_ref[...] * scale_ref[...] + bias_ref[...], 0.0)
        # Fused fc3: tiny (512,43) matmul + bias, single lane-masked store.
        o_ref[...] = (
            jnp.dot(h, w3_ref[...], preferred_element_type=jnp.float32)
            + b3_ref[...]
        ).astype(o_ref.dtype)


def classifier_fused(x_bf16, w2_t_bf16, bn_scale, bn_bias, w3_t, b3, *,
                     tk=1280):
    """x_bf16: (B, 6400) bf16, w2_t_bf16: (6400, 512) bf16,
    bn_scale/bn_bias: (1, 512) f32, w3_t: (512, 43) f32, b3: (1, 43) f32."""
    b, k_dim = x_bf16.shape
    _, n_hidden = w2_t_bf16.shape
    _, n_out = w3_t.shape
    assert k_dim % tk == 0
    nk = k_dim // tk
    return pl.pallas_call(
        _classifier_kernel,
        out_shape=jax.ShapeDtypeStruct((b, n_out), jnp.float32),
        grid_spec=pltpu.PrefetchScalarGridSpec(
            num_scalar_prefetch=0,
            grid=(nk,),
            in_specs=[
                pl.BlockSpec((b, tk), lambda k: (0, k)),          # x tile
                pl.BlockSpec((tk, n_hidden), lambda k: (k, 0)),   # W2 tile
                pl.BlockSpec((1, n_hidden), lambda k: (0, 0)),    # bn scale
                pl.BlockSpec((1, n_hidden), lambda k: (0, 0)),    # bn bias
                pl.BlockSpec((n_hidden, n_out), lambda k: (0, 0)),  # W3 (full)
                pl.BlockSpec((1, n_out), lambda k: (0, 0)),       # b3 (full)
            ],
            out_specs=pl.BlockSpec((b, n_out), lambda k: (0, 0)),
            scratch_shapes=[pltpu.VMEM((b, n_hidden), jnp.float32)],
        ),
        compiler_params=pltpu.CompilerParams(
            dimension_semantics=("arbitrary",),
        ),
    )(x_bf16, w2_t_bf16, bn_scale, bn_bias, w3_t, b3)


# -----------------------------------------------------------------------------
# Full Classifier forward (inference mode).
# -----------------------------------------------------------------------------
@jax.jit
def classifier_forward(x, params):
    # Fold eval-mode BatchNorm1d into a per-feature affine:
    #   bn(z) = z * scale + shift,  scale = gamma*rsqrt(var+eps),
    #                               shift = beta - mean*scale
    # fc2 bias folds in too: (x@W2 + b2)*scale + shift = x@W2*scale + bias_eff
    eps = 1e-5
    scale = params["bn_gamma"] * jax.lax.rsqrt(params["bn_var"] + eps)
    shift = params["bn_beta"] - params["bn_mean"] * scale
    bias_eff = params["b2"] * scale + shift

    # bf16 matmul inputs (HBM-BW bound); f32 accumulate/epilogue in-kernel.
    x_bf16 = x.astype(jnp.bfloat16)
    # TODO(synk): dropout omitted (identity at inference; module uses training flag).
    # TODO(synk): on v7x only one TensorCore is used (fc3 fusion precludes the
    # N-split across cores); keep fc_out separate + N-split if targeting v7x.
    return classifier_fused(
        x_bf16,
        params["w2_t"],
        scale.reshape(1, -1),
        bias_eff.reshape(1, -1),
        params["w3_t"],
        params["b3"].reshape(1, -1),
    )


def init_params(key):
    k = jax.random.split(key, 8)
    in2, out2, out3 = 6400, 512, 43
    params = {
        # stored pre-transposed: (in_features, out_features); W2 kept in bf16.
        "w2_t": (
            jax.random.normal(k[0], (in2, out2), jnp.float32) * (1.0 / in2**0.5)
        ).astype(jnp.bfloat16),
        "b2": jax.random.normal(k[1], (out2,), jnp.float32) * 0.01,
        "bn_gamma": 1.0 + 0.1 * jax.random.normal(k[2], (out2,), jnp.float32),
        "bn_beta": 0.1 * jax.random.normal(k[3], (out2,), jnp.float32),
        "bn_mean": 0.1 * jax.random.normal(k[4], (out2,), jnp.float32),
        "bn_var": jnp.abs(
            1.0 + 0.1 * jax.random.normal(k[5], (out2,), jnp.float32)
        ),
        "w3_t": jax.random.normal(k[6], (out2, out3), jnp.float32)
        * (1.0 / out2**0.5),
        "b3": jax.random.normal(k[7], (out3,), jnp.float32) * 0.01,
    }
    return params


def _reference_forward(x, params):
    # Pure-JAX reference using the same bf16 inputs the kernel sees (upcast),
    # so the only difference is accumulation order.
    eps = 1e-5
    xf = x.astype(jnp.bfloat16).astype(jnp.float32)
    w2 = params["w2_t"].astype(jnp.float32)
    z = xf @ w2 + params["b2"]
    z = (z - params["bn_mean"]) * jax.lax.rsqrt(params["bn_var"] + eps)
    z = z * params["bn_gamma"] + params["bn_beta"]
    z = jnp.maximum(z, 0.0)
    return z @ params["w3_t"] + params["b3"]


if __name__ == "__main__":
    key = jax.random.PRNGKey(0)
    kx, kp = jax.random.split(key)

    batch = 8
    x = jax.random.normal(kx, (batch, 6400), jnp.float32)  # Linear(6400,...) input
    params = init_params(kp)

    out = classifier_forward(x, params)
    out = jax.block_until_ready(out)
    assert out.shape == (batch, 43), out.shape

    ref = _reference_forward(x, params)
    err = float(jnp.max(jnp.abs(out - ref)))
    assert jnp.allclose(out, ref, atol=2e-2, rtol=2e-2), err

    print("KERNEL_OK")
</pallas_src>

<mosaic_0001>
module attributes {stable_mosaic.version = 11 : i64} {
  func.func @_classifier_kernel(%arg0: i32, %arg1: memref<8x1280xbf16, #tpu.memory_space<vmem>>, %arg2: memref<1280x512xbf16, #tpu.memory_space<vmem>>, %arg3: memref<1x512xf32, #tpu.memory_space<vmem>>, %arg4: memref<1x512xf32, #tpu.memory_space<vmem>>, %arg5: memref<512x43xf32, #tpu.memory_space<vmem>>, %arg6: memref<1x43xf32, #tpu.memory_space<vmem>>, %arg7: memref<8x43xf32, #tpu.memory_space<vmem>>, %arg8: memref<8x512xf32, #tpu.memory_space<vmem>>) attributes {dimension_semantics = [#tpu.dimension_semantics<arbitrary>], iteration_bounds = array<i64: 5>, scalar_prefetch = 0 : i64, scratch_operands = 1 : i64, tpu.core_type = #tpu.core_type<tc>, window_params = [{transform_indices = @transform_0, window_bounds = array<i64: 8, 1280>}, {transform_indices = @transform_1, window_bounds = array<i64: 1280, 512>}, {pipeline_mode = #tpu.pipeline_mode<synchronous>, transform_indices = @transform_2, window_bounds = array<i64: 1, 512>}, {pipeline_mode = #tpu.pipeline_mode<synchronous>, transform_indices = @transform_3, window_bounds = array<i64: 1, 512>}, {pipeline_mode = #tpu.pipeline_mode<synchronous>, transform_indices = @transform_4, window_bounds = array<i64: 512, 43>}, {pipeline_mode = #tpu.pipeline_mode<synchronous>, transform_indices = @transform_5, window_bounds = array<i64: 1, 43>}, {pipeline_mode = #tpu.pipeline_mode<synchronous>, transform_indices = @transform_6, window_bounds = array<i64: 8, 43>}]} {
    %c0_i32 = arith.constant 0 : i32
    %0 = arith.cmpi eq, %arg0, %c0_i32 : i32
    %1 = arith.extui %0 : i1 to i32
    %c0_i32_0 = arith.constant 0 : i32
    %2 = arith.cmpi ne, %1, %c0_i32_0 : i32
    scf.if %2 {
      %cst_9 = arith.constant 0.000000e+00 : f32
      %12 = vector.broadcast %cst_9 : f32 to vector<8x512xf32>
      %c0_10 = arith.constant 0 : index
      %c0_11 = arith.constant 0 : index
      %13 = vector.load %arg8[%c0_10, %c0_11] : memref<8x512xf32, #tpu.memory_space<vmem>>, vector<8x512xf32>
      tpu.vector_store %arg8[%c0_10, %c0_11], %12 {strides = array<i32>} : memref<8x512xf32, #tpu.memory_space<vmem>>, vector<8x512xf32>,
    } else {
    }
    %c0 = arith.constant 0 : index
    %c0_1 = arith.constant 0 : index
    %3 = vector.load %arg8[%c0, %c0_1] : memref<8x512xf32, #tpu.memory_space<vmem>>, vector<8x512xf32>
    %c0_2 = arith.constant 0 : index
    %c0_3 = arith.constant 0 : index
    %4 = vector.load %arg1[%c0_2, %c0_3] : memref<8x1280xbf16, #tpu.memory_space<vmem>>, vector<8x1280xbf16>
    %c0_4 = arith.constant 0 : index
    %c0_5 = arith.constant 0 : index
    %5 = vector.load %arg2[%c0_4, %c0_5] : memref<1280x512xbf16, #tpu.memory_space<vmem>>, vector<1280x512xbf16>
    %cst = arith.constant dense<0.000000e+00> : vector<8x512xf32>
    %6 = tpu.matmul %4, %5, %cst {dimension_numbers = #tpu.dot_dimension_numbers<[1], [0], [0], [1], [0, 0, 1, 1], [], []>} : vector<8x1280xbf16>, vector<1280x512xbf16>, vector<8x512xf32> -> vector<8x512xf32>
    %7 = arith.addf %3, %6 : vector<8x512xf32>
    %c0_6 = arith.constant 0 : index
    %c0_7 = arith.constant 0 : index
    %8 = vector.load %arg8[%c0_6, %c0_7] : memref<8x512xf32, #tpu.memory_space<vmem>>, vector<8x512xf32>
    tpu.vector_store %arg8[%c0_6, %c0_7], %7 {strides = array<i32>} : memref<8x512xf32, #tpu.memory_space<vmem>>, vector<8x512xf32>,
    %c4_i32 = arith.constant 4 : i32
    %9 = arith.cmpi eq, %arg0, %c4_i32 : i32
    %10 = arith.extui %9 : i1 to i32
    %c0_i32_8 = arith.constant 0 : i32
    %11 = arith.cmpi ne, %10, %c0_i32_8 : i32
    scf.if %11 {
      %c0_9 = arith.constant 0 : index
      %c0_10 = arith.constant 0 : index
      %12 = vector.load %arg8[%c0_9, %c0_10] : memref<8x512xf32, #tpu.memory_space<vmem>>, vector<8x512xf32>
      %c0_11 = arith.constant 0 : index
      %c0_12 = arith.constant 0 : index
      %13 = vector.load %arg3[%c0_11, %c0_12] : memref<1x512xf32, #tpu.memory_space<vmem>>, vector<1x512xf32>
      %14 = vector.broadcast %13 : vector<1x512xf32> to vector<8x512xf32>
      %15 = arith.mulf %12, %14 : vector<8x512xf32>
      %c0_13 = arith.constant 0 : index
      %c0_14 = arith.constant 0 : index
      %16 = vector.load %arg4[%c0_13, %c0_14] : memref<1x512xf32, #tpu.memory_space<vmem>>, vector<1x512xf32>
      %17 = vector.broadcast %16 : vector<1x512xf32> to vector<8x512xf32>
      %18 = arith.addf %15, %17 : vector<8x512xf32>
      %cst_15 = arith.constant 0.000000e+00 : f32
      %19 = vector.broadcast %cst_15 : f32 to vector<8x512xf32>
      %20 = arith.maximumf %18, %19 : vector<8x512xf32>
      %c0_16 = arith.constant 0 : index
      %c0_17 = arith.constant 0 : index
      %21 = vector.load %arg5[%c0_16, %c0_17] : memref<512x43xf32, #tpu.memory_space<vmem>>, vector<512x43xf32>
      %cst_18 = arith.constant dense<0.000000e+00> : vector<8x43xf32>
      %22 = tpu.matmul %20, %21, %cst_18 {dimension_numbers = #tpu.dot_dimension_numbers<[1], [0], [0], [1], [0, 0, 1, 1], [], []>} : vector<8x512xf32>, vector<512x43xf32>, vector<8x43xf32> -> vector<8x43xf32>
      %c0_19 = arith.constant 0 : index
      %c0_20 = arith.constant 0 : index
      %23 = vector.load %arg6[%c0_19, %c0_20] : memref<1x43xf32, #tpu.memory_space<vmem>>, vector<1x43xf32>
      %24 = vector.broadcast %23 : vector<1x43xf32> to vector<8x43xf32>
      %25 = arith.addf %22, %24 : vector<8x43xf32>
      %c0_21 = arith.constant 0 : index
      %c0_22 = arith.constant 0 : index
      %26 = vector.load %arg7[%c0_21, %c0_22] : memref<8x43xf32, #tpu.memory_space<vmem>>, vector<8x43xf32>
      tpu.vector_store %arg7[%c0_21, %c0_22], %25 {strides = array<i32>} : memref<8x43xf32, #tpu.memory_space<vmem>>, vector<8x43xf32>,
    } else {
    }
    return
  }
  func.func @transform_0(%arg0: i32) -> (i32, i32) {
    %c0_i32 = arith.constant 0 : i32
    %c0_i32_0 = arith.constant 0 : i32
    return %c0_i32, %arg0 : i32, i32
  }
  func.func @transform_1(%arg0: i32) -> (i32, i32) {
    %c0_i32 = arith.constant 0 : i32
    %c0_i32_0 = arith.constant 0 : i32
    return %arg0, %c0_i32 : i32, i32
  }
  func.func @transform_2(%arg0: i32) -> (i32, i32) {
    %c0_i32 = arith.constant 0 : i32
    %c0_i32_0 = arith.constant 0 : i32
    %c0_i32_1 = arith.constant 0 : i32
    return %c0_i32, %c0_i32_0 : i32, i32
  }
  func.func @transform_3(%arg0: i32) -> (i32, i32) {
    %c0_i32 = arith.constant 0 : i32
    %c0_i32_0 = arith.constant 0 : i32
    %c0_i32_1 = arith.constant 0 : i32
    return %c0_i32, %c0_i32_0 : i32, i32
  }
  func.func @transform_4(%arg0: i32) -> (i32, i32) {
    %c0_i32 = arith.constant 0 : i32
    %c0_i32_0 = arith.constant 0 : i32
    %c0_i32_1 = arith.constant 0 : i32
    return %c0_i32, %c0_i32_0 : i32, i32
  }
  func.func @transform_5(%arg0: i32) -> (i32, i32) {
    %c0_i32 = arith.constant 0 : i32
    %c0_i32_0 = arith.constant 0 : i32
    %c0_i32_1 = arith.constant 0 : i32
    return %c0_i32, %c0_i32_0 : i32, i32
  }
  func.func @transform_6(%arg0: i32) -> (i32, i32) {
    %c0_i32 = arith.constant 0 : i32
    %c0_i32_0 = arith.constant 0 : i32
    %c0_i32_1 = arith.constant 0 : i32
    return %c0_i32, %c0_i32_0 : i32, i32
  }
}

</mosaic_0001>

<llo_original>
// kernel: classifier_forward.1
$region0: #{classifier_forward.1}
  #allocation0 [shape = 'u32[]', space=smem, size = 0x4, offset = 0x4, fixed_abs, tag = 'smem constant byte address 0x4 - core index']
  #allocation1 [shape = 'u32[144,128]{1,0:T(1,128)}', space=vmem, size = 0x12000, scoped, tag = 'internal scratch']
  #allocation2 [shape = 'f32[8,512]{1,0:T(8,128)}', space=vmem, size = 0x4000, scoped, tag = 'scratch operand']
  %s0 = inlined_call_operand.vmem [shape: bf16[8,6400], index: 0, kind: input, shape index: {}]
  %s1 = inlined_call_operand.hbm [shape: bf16[6400,512], index: 1, kind: input, shape index: {}]
  %s2 = inlined_call_operand.vmem [shape: f32[1,512], index: 2, kind: input, shape index: {}]
  %s3 = inlined_call_operand.vmem [shape: f32[1,512], index: 3, kind: input, shape index: {}]
  %s4 = inlined_call_operand.vmem [shape: f32[512,43], index: 4, kind: input, shape index: {}]
  %s5 = inlined_call_operand.hbm [shape: f32[1,43], index: 5, kind: input, shape index: {}]
  %s6 = inlined_call_operand.hbm [shape: f32[8,43], index: 6, kind: output, shape index: {}]
  %s7 = sld [smem:[#allocation0]]
  $region73: #{classifier_forward.1} parent=0
    _
  %s9 = ssub.s32 1, %s7
  %s10 = scalar_select 0, %s9, %s7
  $region1: #{classifier_forward.1} parent=0
    #allocation3 [shape = 'u8[2621440]{0}', space=vmem, size = 0x280000, scoped, tag = 'input window, operand 1']
    #allocation4 [shape = 's32[2]{0}', space=sflag, size = 0x8, scoped, tag = 'scoped memory for classifier_forward.1']
    #allocation5 [shape = 's32[2]{0}', space=sflag, size = 0x8, scoped, tag = 'scoped memory for classifier_forward.1']
    #allocation6 [shape = 'u8[512]{0}', space=vmem, size = 0x400, scoped, tag = 'input window, operand 5, single buffered']
    #allocation7 [shape = 's32[1]{0}', space=sflag, size = 0x4, scoped, tag = 'scoped memory for classifier_forward.1']
    #allocation8 [shape = 'u8[4096]{0}', space=vmem, size = 0x1000, scoped, tag = 'output window, operand 0, single buffered']
    %11 = vsyncpa [#allocation4], 0
    %s12 = scalar_lea.sflag [#allocation4], 1
    %13 = vsyncpa %s12, 0
    %14 = vsyncpa [#allocation7], 0
    %15 = vsyncpa [#allocation5], 0
    loop: start=0, step=1, limit=7
    $region2: #{classifier_forward.1} parent=1 // loop_pre_header
      _
    $region3: #{classifier_forward.1} parent=1 // loop_header
      %s17 = sphi 0, %s21
      %p18 = scmp.ge.s32.totalorder %s17, 7
      %s27 = sphi 0, %s29
      %s30 = sphi 0, %s27
      %s31 = sphi 0, %s30
      %s47 = sphi 0, %s31
      %s53 = sphi 0, %s55
      %s56 = sphi 0, %s53
      %s57 = sphi 0, %s56
      %s73 = sphi 0, %s57
      %s77 = sphi 0, %s77
      %s79 = sphi 0, %s77
      %s80 = sphi 0, %s79
      %s94 = sphi 0, %s80
      %s98 = sphi 0, %s98
      %s100 = sphi 0, %s98
      %s101 = sphi 0, %s100
      %s115 = sphi 0, %s101
      %s119 = sphi 0, %s119
      %s121 = sphi 0, %s119
      %s122 = sphi 0, %s121
      %s136 = sphi 0, %s122
      %s140 = sphi 0, %s140
      %s142 = sphi 0, %s140
      %s143 = sphi 0, %s142
      %s157 = sphi 0, %s143
      %s161 = sphi 0, %s161
      %s163 = sphi 0, %s161
      %s164 = sphi 0, %s163
      %s178 = sphi 0, %s164
    $region4: #{classifier_forward.1} parent=1 // loop_header_branch
      %20 = sbr.rel (%p18) target = $region8
    $region5: #{classifier_forward.1} parent=1 // loop_body
      %s22 = ssub.s32 %s17, 1
      %s23 = ssub.s32 %s17, 2
      %s24 = sadd.s32 %s17, 1
      %s25 = ssub.s32 %s17, %s24
      %p26 = scmp.eq.s32.totalorder %s25, 0
      %s28 = sadd.s32 %s27, 1
      %s29 = scalar_select %p26, %s27, %s28
      %p32 = pneg %p26
      %p33 = scmp.eq.s32.totalorder %s17, 4
      %p34 = por %p32, %p33
      %p35 = scmp.ne.s32.totalorder %s27, %s30
      %p36 = scmp.eq.s32.totalorder %s17, 0
      %p37 = por %p35, %p36
      %p38 = scmp.ne.s32.totalorder %s27, %s30
      %p39 = scmp.eq.s32.totalorder %s22, 4
      %p40 = por %p38, %p39
      %p41 = scmp.ne.s32.totalorder %s30, %s31
      %p42 = scmp.eq.s32.totalorder %s22, 0
      %p43 = por %p41, %p42
      %p44 = scmp.ne.s32.totalorder %s30, %s31
      %p45 = scmp.eq.s32.totalorder %s23, 4
      %p46 = por %p44, %p45
      %p48 = scmp.ne.s32.totalorder %s31, %s47
      %p49 = scmp.eq.s32.totalorder %s23, 0
      %p50 = por %p48, %p49
      %s51 = ssub.s32 %s17, %s24
      %p52 = scmp.eq.s32.totalorder %s51, 0
      %s54 = sadd.s32 %s53, 1
      %s55 = scalar_select %p52, %s53, %s54
      %p58 = pneg %p52
      %p59 = scmp.eq.s32.totalorder %s17, 4
      %p60 = por %p58, %p59
      %p61 = scmp.ne.s32.totalorder %s53, %s56
      %p62 = scmp.eq.s32.totalorder %s17, 0
      %p63 = por %p61, %p62
      %p64 = scmp.ne.s32.totalorder %s53, %s56
      %p65 = scmp.eq.s32.totalorder %s22, 4
      %p66 = por %p64, %p65
      %p67 = scmp.ne.s32.totalorder %s56, %s57
      %p68 = scmp.eq.s32.totalorder %s22, 0
      %p69 = por %p67, %p68
      %p70 = scmp.ne.s32.totalorder %s56, %s57
      %p71 = scmp.eq.s32.totalorder %s23, 4
      %p72 = por %p70, %p71
      %p74 = scmp.ne.s32.totalorder %s57, %s73
      %p75 = scmp.eq.s32.totalorder %s23, 0
      %p76 = por %p74, %p75
      %s78 = sadd.s32 %s77, 1
      %p81 = scmp.eq.s32.totalorder %s17, 4
      %p82 = scmp.ne.s32.totalorder %s77, %s79
      %p83 = scmp.eq.s32.totalorder %s17, 0
      %p84 = por %p82, %p83
      %p85 = scmp.ne.s32.totalorder %s77, %s79
      %p86 = scmp.eq.s32.totalorder %s22, 4
      %p87 = por %p85, %p86
      %p88 = scmp.ne.s32.totalorder %s79, %s80
      %p89 = scmp.eq.s32.totalorder %s22, 0
      %p90 = por %p88, %p89
      %p91 = scmp.ne.s32.totalorder %s79, %s80
      %p92 = scmp.eq.s32.totalorder %s23, 4
      %p93 = por %p91, %p92
      %p95 = scmp.ne.s32.totalorder %s80, %s94
      %p96 = scmp.eq.s32.totalorder %s23, 0
      %p97 = por %p95, %p96
      %s99 = sadd.s32 %s98, 1
      %p102 = scmp.eq.s32.totalorder %s17, 4
      %p103 = scmp.ne.s32.totalorder %s98, %s100
      %p104 = scmp.eq.s32.totalorder %s17, 0
      %p105 = por %p103, %p104
      %p106 = scmp.ne.s32.totalorder %s98, %s100
      %p107 = scmp.eq.s32.totalorder %s22, 4
      %p108 = por %p106, %p107
      %p109 = scmp.ne.s32.totalorder %s100, %s101
      %p110 = scmp.eq.s32.totalorder %s22, 0
      %p111 = por %p109, %p110
      %p112 = scmp.ne.s32.totalorder %s100, %s101
      %p113 = scmp.eq.s32.totalorder %s23, 4
      %p114 = por %p112, %p113
      %p116 = scmp.ne.s32.totalorder %s101, %s115
      %p117 = scmp.eq.s32.totalorder %s23, 0
      %p118 = por %p116, %p117
      %s120 = sadd.s32 %s119, 1
      %p123 = scmp.eq.s32.totalorder %s17, 4
      %p124 = scmp.ne.s32.totalorder %s119, %s121
      %p125 = scmp.eq.s32.totalorder %s17, 0
      %p126 = por %p124, %p125
      %p127 = scmp.ne.s32.totalorder %s119, %s121
      %p128 = scmp.eq.s32.totalorder %s22, 4
      %p129 = por %p127, %p128
      %p130 = scmp.ne.s32.totalorder %s121, %s122
      %p131 = scmp.eq.s32.totalorder %s22, 0
      %p132 = por %p130, %p131
      %p133 = scmp.ne.s32.totalorder %s121, %s122
      %p134 = scmp.eq.s32.totalorder %s23, 4
      %p135 = por %p133, %p134
      %p137 = scmp.ne.s32.totalorder %s122, %s136
      %p138 = scmp.eq.s32.totalorder %s23, 0
      %p139 = por %p137, %p138
      %s141 = sadd.s32 %s140, 1
      %p144 = scmp.eq.s32.totalorder %s17, 4
      %p145 = scmp.ne.s32.totalorder %s140, %s142
      %p146 = scmp.eq.s32.totalorder %s17, 0
      %p147 = por %p145, %p146
      %p148 = scmp.ne.s32.totalorder %s140, %s142
      %p149 = scmp.eq.s32.totalorder %s22, 4
      %p150 = por %p148, %p149
      %p151 = scmp.ne.s32.totalorder %s142, %s143
      %p152 = scmp.eq.s32.totalorder %s22, 0
      %p153 = por %p151, %p152
      %p154 = scmp.ne.s32.totalorder %s142, %s143
      %p155 = scmp.eq.s32.totalorder %s23, 4
      %p156 = por %p154, %p155
      %p158 = scmp.ne.s32.totalorder %s143, %s157
      %p159 = scmp.eq.s32.totalorder %s23, 0
      %p160 = por %p158, %p159
      %s162 = sadd.s32 %s161, 1
      %p165 = scmp.eq.s32.totalorder %s17, 4
      %p166 = scmp.ne.s32.totalorder %s161, %s163
      %p167 = scmp.eq.s32.totalorder %s17, 0
      %p168 = por %p166, %p167
      %p169 = scmp.ne.s32.totalorder %s161, %s163
      %p170 = scmp.eq.s32.totalorder %s22, 4
      %p171 = por %p169, %p170
      %p172 = scmp.ne.s32.totalorder %s163, %s164
      %p173 = scmp.eq.s32.totalorder %s22, 0
      %p174 = por %p172, %p173
      %p175 = scmp.ne.s32.totalorder %s163, %s164
      %p176 = scmp.eq.s32.totalorder %s23, 4
      %p177 = por %p175, %p176
      %p179 = scmp.ne.s32.totalorder %s164, %s178
      %p180 = scmp.eq.s32.totalorder %s23, 0
      %p181 = por %p179, %p180
      %p182 = scmp.le.s32.totalorder 1, %s17
      %p183 = scmp.lt.s32.totalorder %s17, 6
      %p184 = pnand %p182, %p183
      %p185 = pneg %p184
      // Predicated region
      $region9: #{classifier_forward.1} parent=5 // pred_check
        _
      $region10: #{classifier_forward.1} parent=5 // pred_check_branch
        %187 = sbr.rel (%p184) target = $region12
      $region11: #{classifier_forward.1} parent=5 // pred_region
        %s188 = ssub.s32 %s17, 1
        // Predicated region
        $region13: #{classifier_forward.1} parent=11 // pred_check
          %p189 = pneg %p90
        $region14: #{classifier_forward.1} parent=11 // pred_check_branch
          %191 = sbr.rel (%p189) target = $region16
        $region15: #{classifier_forward.1} parent=11 // pred_region
          _
        $region16: #{classifier_forward.1} parent=11 // pred_fallthru
          _
        // Predicated region
        $region17: #{classifier_forward.1} parent=11 // pred_check
          %p192 = pneg %p111
        $region18: #{classifier_forward.1} parent=11 // pred_check_branch
          %194 = sbr.rel (%p192) target = $region20
        $region19: #{classifier_forward.1} parent=11 // pred_region
          _
        $region20: #{classifier_forward.1} parent=11 // pred_fallthru
          _
        // Predicated region
        $region21: #{classifier_forward.1} parent=11 // pred_check
          %p195 = pneg %p132
        $region22: #{classifier_forward.1} parent=11 // pred_check_branch
          %197 = sbr.rel (%p195) target = $region24
        $region23: #{classifier_forward.1} parent=11 // pred_region
          _
        $region24: #{classifier_forward.1} parent=11 // pred_fallthru
          _
        // Predicated region
        $region25: #{classifier_forward.1} parent=11 // pred_check
          %p198 = pneg %p153
        $region26: #{classifier_forward.1} parent=11 // pred_check_branch
          %200 = sbr.rel (%p198) target = $region28
        $region27: #{classifier_forward.1} parent=11 // pred_region
          %s202 = ssub.s32 16, 16
          %203 = vsyncadd [#allocation7], %s202
          %s205 = sshll.u32 [#allocation6], 4
          %s206 = int_to_ptr.vmem [resolvable:$true] %s205
          %208 = dma.hbm_to_vmem [thread:$0]  %s5, 16, %s206, [#allocation7]
        $region28: #{classifier_forward.1} parent=11 // pred_fallthru
          _
      $region12: #{classifier_forward.1} parent=5 // pred_fallthru
        _
      %p209 = scmp.lt.s32.totalorder %s17, 5
      // Predicated region
      $region29: #{classifier_forward.1} parent=5 // pred_check
        %p210 = pneg %p209
      $region30: #{classifier_forward.1} parent=5 // pred_check_branch
        %212 = sbr.rel (%p210) target = $region32
      $region31: #{classifier_forward.1} parent=5 // pred_region
        // Predicated region
        $region33: #{classifier_forward.1} parent=31 // pred_check
          %p213 = pneg %p37
        $region34: #{classifier_forward.1} parent=31 // pred_check_branch
          %215 = sbr.rel (%p213) target = $region36
        $region35: #{classifier_forward.1} parent=31 // pred_region
          %s216 = smul.u32 10, %s17
          %p217 = scmp.lt.s32.totalorder %s216, 49
          %s218 = scalar_select %p217, %s216, 49
          %s219 = smul.addr %s218, 4
          %s220 = scalar_lea.vmem %s0, %s219
          %s221 = smul.u32 10, %s17
        $region36: #{classifier_forward.1} parent=31 // pred_fallthru
          _
        // Predicated region
        $region37: #{classifier_forward.1} parent=31 // pred_check
          %p222 = pneg %p63
        $region38: #{classifier_forward.1} parent=31 // pred_check_branch
          %224 = sbr.rel (%p222) target = $region40
        $region39: #{classifier_forward.1} parent=31 // pred_region
          %s225 = sand.u32 %s53, 1
          %s226 = scalar_lea.sflag [#allocation4], %s225
          %s227 = sand.u32 %s53, 1
          %s228 = smul.addr %s227, 2560
          %s229 = scalar_lea.vmem [#allocation3], %s228
          %s230 = smul.u32 160, %s17
          %s232 = ssub.s32 40960, 40960
          %233 = vsyncadd %s226, %s232
          %s234 = smul.addr %s230, 4
          %s235 = smul.addr %s234, 64
          %s236 = scalar_lea.hbm %s1, %s235
          %s237 = sshll.u32 %s229, 4
          %s238 = int_to_ptr.vmem [resolvable:$true] %s237
          %243 = dma.hbm_to_vmem [thread:$0]  %s236, 40960, %s238, %s226, 256, 256, 16
        $region40: #{classifier_forward.1} parent=31 // pred_fallthru
          _
      $region32: #{classifier_forward.1} parent=5 // pred_fallthru
        _
      %p244 = scmp.le.s32.totalorder 1, %s17
      %p245 = scmp.lt.s32.totalorder %s17, 6
      %p246 = pnand %p244, %p245
      %p247 = pneg %p246
      // Predicated region
      $region41: #{classifier_forward.1} parent=5 // pred_check
        _
      $region42: #{classifier_forward.1} parent=5 // pred_check_branch
        %249 = sbr.rel (%p246) target = $region44
      $region43: #{classifier_forward.1} parent=5 // pred_region
        %s250 = ssub.s32 %s17, 1
        %s251 = sand.u32 %s56, 1
        %s252 = scalar_lea.sflag [#allocation4], %s251
        %s253 = sand.u32 %s56, 1
        %s254 = smul.addr %s253, 2560
        %s255 = scalar_lea.vmem [#allocation3], %s254
        // Predicated region
        $region45: #{classifier_forward.1} parent=43 // pred_check
          %p256 = pneg %p69
        $region46: #{classifier_forward.1} parent=43 // pred_check_branch
          %258 = sbr.rel (%p256) target = $region48
        $region47: #{classifier_forward.1} parent=43 // pred_region
          %259 = dma.done %s252, 40960
        $region48: #{classifier_forward.1} parent=43 // pred_fallthru
          _
        // Predicated region
        $region49: #{classifier_forward.1} parent=43 // pred_check
          %p260 = pneg %p153
        $region50: #{classifier_forward.1} parent=43 // pred_check_branch
          %262 = sbr.rel (%p260) target = $region52
        $region51: #{classifier_forward.1} parent=43 // pred_region
          %263 = dma.done [#allocation7], 16
        $region52: #{classifier_forward.1} parent=43 // pred_fallthru
          _
        %s264 = smul.u32 10, %s22
        %p265 = scmp.lt.s32.totalorder %s264, 49
        %s266 = scalar_select %p265, %s264, 49
        %s267 = smul.addr %s266, 4
        %s268 = scalar_lea.vmem %s0, %s267
        %p269 = pneg %p43
        %p270 = pneg %p40
        %s271 = sand.u32 %s56, 1
        %s272 = scalar_lea.sflag [#allocation4], %s271
        %s273 = sand.u32 %s56, 1
        %s274 = smul.addr %s273, 2560
        %s275 = scalar_lea.vmem [#allocation3], %s274
        %p276 = pneg %p69
        %p277 = pneg %p66
        %p278 = pneg %p90
        %p279 = pneg %p87
        %p280 = pneg %p111
        %p281 = pneg %p108
        %p282 = pneg %p132
        %p283 = pneg %p129
        %p284 = pneg %p153
        %p285 = pneg %p150
        %p286 = pneg %p174
        %p287 = pneg %p171
        %s288 = smul.u32 10, %s22
        %p289 = scmp.lt.s32.totalorder %s288, 49
        %s290 = scalar_select %p289, %s288, 49
        %s291 = smul.addr %s290, 4
        %s292 = scalar_lea.vmem %s0, %s291
        %s293 = smul.u32 10, %s22
        %s294 = smul.u32 160, %s22
        %p295 = scmp.eq.s32.totalorder %s22, 0
        // Predicated region
        $region53: #{classifier_forward.1} parent=43 // pred_check
          %p296 = pneg %p295
        $region54: #{classifier_forward.1} parent=43 // pred_check_branch
          %298 = sbr.rel (%p296) target = $region56
        $region55: #{classifier_forward.1} parent=43 // pred_region
          %299 = vst [vmem:[#allocation2] sm:$0xff] 0.0
          %300 = vst [vmem:[#allocation2 + $0x8] sm:$0xff] 0.0
          %301 = vst [vmem:[#allocation2 + $0x10] sm:$0xff] 0.0
          %302 = vst [vmem:[#allocation2 + $0x18] sm:$0xff] 0.0
        $region56: #{classifier_forward.1} parent=43 // pred_fallthru
          _
        %v303 = vld [vmem:[#allocation2] sm:$0xff]
        %v304 = vld [vmem:[#allocation2 + $0x8] sm:$0xff]
        %v305 = vld [vmem:[#allocation2 + $0x10] sm:$0xff]
        %v306 = vld [vmem:[#allocation2 + $0x18] sm:$0xff]
        %v307 = vld [vmem:[%s292] sm:$0xff]
        %v308 = vld [vmem:[%s292 + $0x8] sm:$0xff]
        %v309 = vld [vmem:[%s292 + $0x10] sm:$0xff]
        %v310 = vld [vmem:[%s292 + $0x18] sm:$0xff]
        %v311 = vld [vmem:[%s292 + $0x20] sm:$0xff]
        %v312 = vld [vmem:[%s255] sm:$0xff]
        %v313 = vld [vmem:[%s255 + $0x8] sm:$0xff]
        %v314 = vld [vmem:[%s255 + $0x10] sm:$0xff]
        %v315 = vld [vmem:[%s255 + $0x18] sm:$0xff]
        %v316 = vld [vmem:[%s255 + $0x20] sm:$0xff]
        %v317 = vld [vmem:[%s255 + $0x28] sm:$0xff]
        %v318 = vld [vmem:[%s255 + $0x30] sm:$0xff]
        %v319 = vld [vmem:[%s255 + $0x38] sm:$0xff]
        %v320 = vld [vmem:[%s255 + $0x40] sm:$0xff]
        %v321 = vld [vmem:[%s255 + $0x48] sm:$0xff]
        %v322 = vld [vmem:[%s255 + $0x50] sm:$0xff]
        %v323 = vld [vmem:[%s255 + $0x58] sm:$0xff]
        %v324 = vld [vmem:[%s255 + $0x60] sm:$0xff]
        %v325 = vld [vmem:[%s255 + $0x68] sm:$0xff]
        %v326 = vld [vmem:[%s255 + $0x70] sm:$0xff]
        %v327 = vld [vmem:[%s255 + $0x78] sm:$0xff]
        %v328 = vld [vmem:[%s255 + $0x80] sm:$0xff]
        %v329 = vld [vmem:[%s255 + $0x88] sm:$0xff]
        %v330 = vld [vmem:[%s255 + $0x90] sm:$0xff]
        %v331 = vld [vmem:[%s255 + $0x98] sm:$0xff]
        %v332 = vld [vmem:[%s255 + $0xa0] sm:$0xff]
        %v333 = vld [vmem:[%s255 + $0xa8] sm:$0xff]
        %v334 = vld [vmem:[%s255 + $0xb0] sm:$0xff]
        %v335 = vld [vmem:[%s255 + $0xb8] sm:$0xff]
        %v336 = vld [vmem:[%s255 + $0xc0] sm:$0xff]
        %v337 = vld [vmem:[%s255 + $0xc8] sm:$0xff]
        %v338 = vld [vmem:[%s255 + $0xd0] sm:$0xff]
        %v339 = vld [vmem:[%s255 + $0xd8] sm:$0xff]
        %v340 = vld [vmem:[%s255 + $0xe0] sm:$0xff]
        %v341 = vld [vmem:[%s255 + $0xe8] sm:$0xff]
        %v342 = vld [vmem:[%s255 + $0xf0] sm:$0xff]
        %v343 = vld [vmem:[%s255 + $0xf8] sm:$0xff]
        %v344 = vld [vmem:[%s255 + $0x100] sm:$0xff]
        %v345 = vld [vmem:[%s255 + $0x108] sm:$0xff]
        %v346 = vld [vmem:[%s255 + $0x110] sm:$0xff]
        %v347 = vld [vmem:[%s255 + $0x118] sm:$0xff]
        %v348 = vld [vmem:[%s255 + $0x120] sm:$0xff]
        %v349 = vld [vmem:[%s255 + $0x128] sm:$0xff]
        %v350 = vld [vmem:[%s255 + $0x130] sm:$0xff]
        %v351 = vld [vmem:[%s255 + $0x138] sm:$0xff]
        %v352 = vld [vmem:[%s255 + $0x140] sm:$0xff]
        %v353 = vld [vmem:[%s255 + $0x148] sm:$0xff]
        %v354 = vld [vmem:[%s255 + $0x150] sm:$0xff]
        %v355 = vld [vmem:[%s255 + $0x158] sm:$0xff]
        %v356 = vld [vmem:[%s255 + $0x160] sm:$0xff]
        %v357 = vld [vmem:[%s255 + $0x168] sm:$0xff]
        %v358 = vld [vmem:[%s255 + $0x170] sm:$0xff]
        %v359 = vld [vmem:[%s255 + $0x178] sm:$0xff]
        %v360 = vld [vmem:[%s255 + $0x180] sm:$0xff]
        %v361 = vld [vmem:[%s255 + $0x188] sm:$0xff]
        %v362 = vld [vmem:[%s255 + $0x190] sm:$0xff]
        %v363 = vld [vmem:[%s255 + $0x198] sm:$0xff]
        %v364 = vld [vmem:[%s255 + $0x1a0] sm:$0xff]
        %v365 = vld [vmem:[%s255 + $0x1a8] sm:$0xff]
        %v366 = vld [vmem:[%s255 + $0x1b0] sm:$0xff]
        %v367 = vld [vmem:[%s255 + $0x1b8] sm:$0xff]
        %v368 = vld [vmem:[%s255 + $0x1c0] sm:$0xff]
        %v369 = vld [vmem:[%s255 + $0x1c8] sm:$0xff]
        %v370 = vld [vmem:[%s255 + $0x1d0] sm:$0xff]
        %v371 = vld [vmem:[%s255 + $0x1d8] sm:$0xff]
        %v372 = vld [vmem:[%s255 + $0x1e0] sm:$0xff]
        %v373 = vld [vmem:[%s255 + $0x1e8] sm:$0xff]
        %v374 = vld [vmem:[%s255 + $0x1f0] sm:$0xff]
        %v375 = vld [vmem:[%s255 + $0x1f8] sm:$0xff]
        %v376 = vld [vmem:[%s255 + $0x200] sm:$0xff]
        %v377 = vld [vmem:[%s255 + $0x208] sm:$0xff]
        %v378 = vld [vmem:[%s255 + $0x210] sm:$0xff]
        %v379 = vld [vmem:[%s255 + $0x218] sm:$0xff]
        %v380 = vld [vmem:[%s255 + $0x220] sm:$0xff]
        %v381 = vld [vmem:[%s255 + $0x228] sm:$0xff]
        %v382 = vld [vmem:[%s255 + $0x230] sm:$0xff]
        %v383 = vld [vmem:[%s255 + $0x238] sm:$0xff]
        %v384 = vld [vmem:[%s255 + $0x240] sm:$0xff]
        %v385 = vld [vmem:[%s255 + $0x248] sm:$0xff]
        %v386 = vld [vmem:[%s255 + $0x250] sm:$0xff]
        %v387 = vld [vmem:[%s255 + $0x258] sm:$0xff]
        %v388 = vld [vmem:[%s255 + $0x260] sm:$0xff]
        %v389 = vld [vmem:[%s255 + $0x268] sm:$0xff]
        %v390 = vld [vmem:[%s255 + $0x270] sm:$0xff]
        %v391 = vld [vmem:[%s255 + $0x278] sm:$0xff]
        %v392 = vld [vmem:[%s255 + $0x280] sm:$0xff]
        %v393 = vld [vmem:[%s255 + $0x288] sm:$0xff]
        %v394 = vld [vmem:[%s255 + $0x290] sm:$0xff]
        %v395 = vld [vmem:[%s255 + $0x298] sm:$0xff]
        %v396 = vld [vmem:[%s255 + $0x2a0] sm:$0xff]
        %v397 = vld [vmem:[%s255 + $0x2a8] sm:$0xff]
        %v398 = vld [vmem:[%s255 + $0x2b0] sm:$0xff]
        %v399 = vld [vmem:[%s255 + $0x2b8] sm:$0xff]
        %v400 = vld [vmem:[%s255 + $0x2c0] sm:$0xff]
        %v401 = vld [vmem:[%s255 + $0x2c8] sm:$0xff]
        %v402 = vld [vmem:[%s255 + $0x2d0] sm:$0xff]
        %v403 = vld [vmem:[%s255 + $0x2d8] sm:$0xff]
        %v404 = vld [vmem:[%s255 + $0x2e0] sm:$0xff]
        %v405 = vld [vmem:[%s255 + $0x2e8] sm:$0xff]
        %v406 = vld [vmem:[%s255 + $0x2f0] sm:$0xff]
        %v407 = vld [vmem:[%s255 + $0x2f8] sm:$0xff]
        %v408 = vld [vmem:[%s255 + $0x300] sm:$0xff]
        %v409 = vld [vmem:[%s255 + $0x308] sm:$0xff]
        %v410 = vld [vmem:[%s255 + $0x310] sm:$0xff]
        %v411 = vld [vmem:[%s255 + $0x318] sm:$0xff]
        %v412 = vld [vmem:[%s255 + $0x320] sm:$0xff]
        %v413 = vld [vmem:[%s255 + $0x328] sm:$0xff]
        %v414 = vld [vmem:[%s255 + $0x330] sm:$0xff]
        %v415 = vld [vmem:[%s255 + $0x338] sm:$0xff]
        %v416 = vld [vmem:[%s255 + $0x340] sm:$0xff]
        %v417 = vld [vmem:[%s255 + $0x348] sm:$0xff]
        %v418 = vld [vmem:[%s255 + $0x350] sm:$0xff]
        %v419 = vld [vmem:[%s255 + $0x358] sm:$0xff]
        %v420 = vld [vmem:[%s255 + $0x360] sm:$0xff]
        %v421 = vld [vmem:[%s255 + $0x368] sm:$0xff]
        %v422 = vld [vmem:[%s255 + $0x370] sm:$0xff]
        %v423 = vld [vmem:[%s255 + $0x378] sm:$0xff]
        %v424 = vld [vmem:[%s255 + $0x380] sm:$0xff]
        %v425 = vld [vmem:[%s255 + $0x388] sm:$0xff]
        %v426 = vld [vmem:[%s255 + $0x390] sm:$0xff]
        %v427 = vld [vmem:[%s255 + $0x398] sm:$0xff]
        %v428 = vld [vmem:[%s255 + $0x3a0] sm:$0xff]
        %v429 = vld [vmem:[%s255 + $0x3a8] sm:$0xff]
        %v430 = vld [vmem:[%s255 + $0x3b0] sm:$0xff]
        %v431 = vld [vmem:[%s255 + $0x3b8] sm:$0xff]
        %v432 = vld [vmem:[%s255 + $0x3c0] sm:$0xff]
        %v433 = vld [vmem:[%s255 + $0x3c8] sm:$0xff]
        %v434 = vld [vmem:[%s255 + $0x3d0] sm:$0xff]
        %v435 = vld [vmem:[%s255 + $0x3d8] sm:$0xff]
        %v436 = vld [vmem:[%s255 + $0x3e0] sm:$0xff]
        %v437 = vld [vmem:[%s255 + $0x3e8] sm:$0xff]
        %v438 = vld [vmem:[%s255 + $0x3f0] sm:$0xff]
        %v439 = vld [vmem:[%s255 + $0x3f8] sm:$0xff]
        %v440 = vld [vmem:[%s255 + $0x400] sm:$0xff]
        %v441 = vld [vmem:[%s255 + $0x408] sm:$0xff]
        %v442 = vld [vmem:[%s255 + $0x410] sm:$0xff]
        %v443 = vld [vmem:[%s255 + $0x418] sm:$0xff]
        %v444 = vld [vmem:[%s255 + $0x420] sm:$0xff]
        %v445 = vld [vmem:[%s255 + $0x428] sm:$0xff]
        %v446 = vld [vmem:[%s255 + $0x430] sm:$0xff]
        %v447 = vld [vmem:[%s255 + $0x438] sm:$0xff]
        %v448 = vld [vmem:[%s255 + $0x440] sm:$0xff]
        %v449 = vld [vmem:[%s255 + $0x448] sm:$0xff]
        %v450 = vld [vmem:[%s255 + $0x450] sm:$0xff]
        %v451 = vld [vmem:[%s255 + $0x458] sm:$0xff]
        %v452 = vld [vmem:[%s255 + $0x460] sm:$0xff]
        %v453 = vld [vmem:[%s255 + $0x468] sm:$0xff]
        %v454 = vld [vmem:[%s255 + $0x470] sm:$0xff]
        %v455 = vld [vmem:[%s255 + $0x478] sm:$0xff]
        %v456 = vld [vmem:[%s255 + $0x480] sm:$0xff]
        %v457 = vld [vmem:[%s255 + $0x488] sm:$0xff]
        %v458 = vld [vmem:[%s255 + $0x490] sm:$0xff]
        %v459 = vld [vmem:[%s255 + $0x498] sm:$0xff]
        %v460 = vld [vmem:[%s255 + $0x4a0] sm:$0xff]
        %v461 = vld [vmem:[%s255 + $0x4a8] sm:$0xff]
        %v462 = vld [vmem:[%s255 + $0x4b0] sm:$0xff]
        %v463 = vld [vmem:[%s255 + $0x4b8] sm:$0xff]
        %v464 = vld [vmem:[%s255 + $0x4c0] sm:$0xff]
        %v465 = vld [vmem:[%s255 + $0x4c8] sm:$0xff]
        %v466 = vld [vmem:[%s255 + $0x4d0] sm:$0xff]
        %v467 = vld [vmem:[%s255 + $0x4d8] sm:$0xff]
        %v468 = vld [vmem:[%s255 + $0x4e0] sm:$0xff]
        %v469 = vld [vmem:[%s255 + $0x4e8] sm:$0xff]
        %v470 = vld [vmem:[%s255 + $0x4f0] sm:$0xff]
        %v471 = vld [vmem:[%s255 + $0x4f8] sm:$0xff]
        %v472 = vld [vmem:[%s255 + $0x500] sm:$0xff]
        %v473 = vld [vmem:[%s255 + $0x508] sm:$0xff]
        %v474 = vld [vmem:[%s255 + $0x510] sm:$0xff]
        %v475 = vld [vmem:[%s255 + $0x518] sm:$0xff]
        %v476 = vld [vmem:[%s255 + $0x520] sm:$0xff]
        %v477 = vld [vmem:[%s255 + $0x528] sm:$0xff]
        %v478 = vld [vmem:[%s255 + $0x530] sm:$0xff]
        %v479 = vld [vmem:[%s255 + $0x538] sm:$0xff]
        %v480 = vld [vmem:[%s255 + $0x540] sm:$0xff]
        %v481 = vld [vmem:[%s255 + $0x548] sm:$0xff]
        %v482 = vld [vmem:[%s255 + $0x550] sm:$0xff]
        %v483 = vld [vmem:[%s255 + $0x558] sm:$0xff]
        %v484 = vld [vmem:[%s255 + $0x560] sm:$0xff]
        %v485 = vld [vmem:[%s255 + $0x568] sm:$0xff]
        %v486 = vld [vmem:[%s255 + $0x570] sm:$0xff]
        %v487 = vld [vmem:[%s255 + $0x578] sm:$0xff]
        %v488 = vld [vmem:[%s255 + $0x580] sm:$0xff]
        %v489 = vld [vmem:[%s255 + $0x588] sm:$0xff]
        %v490 = vld [vmem:[%s255 + $0x590] sm:$0xff]
        %v491 = vld [vmem:[%s255 + $0x598] sm:$0xff]
        %v492 = vld [vmem:[%s255 + $0x5a0] sm:$0xff]
        %v493 = vld [vmem:[%s255 + $0x5a8] sm:$0xff]
        %v494 = vld [vmem:[%s255 + $0x5b0] sm:$0xff]
        %v495 = vld [vmem:[%s255 + $0x5b8] sm:$0xff]
        %v496 = vld [vmem:[%s255 + $0x5c0] sm:$0xff]
        %v497 = vld [vmem:[%s255 + $0x5c8] sm:$0xff]
        %v498 = vld [vmem:[%s255 + $0x5d0] sm:$0xff]
        %v499 = vld [vmem:[%s255 + $0x5d8] sm:$0xff]
        %v500 = vld [vmem:[%s255 + $0x5e0] sm:$0xff]
        %v501 = vld [vmem:[%s255 + $0x5e8] sm:$0xff]
        %v502 = vld [vmem:[%s255 + $0x5f0] sm:$0xff]
        %v503 = vld [vmem:[%s255 + $0x5f8] sm:$0xff]
        %v504 = vld [vmem:[%s255 + $0x600] sm:$0xff]
        %v505 = vld [vmem:[%s255 + $0x608] sm:$0xff]
        %v506 = vld [vmem:[%s255 + $0x610] sm:$0xff]
        %v507 = vld [vmem:[%s255 + $0x618] sm:$0xff]
        %v508 = vld [vmem:[%s255 + $0x620] sm:$0xff]
        %v509 = vld [vmem:[%s255 + $0x628] sm:$0xff]
        %v510 = vld [vmem:[%s255 + $0x630] sm:$0xff]
        %v511 = vld [vmem:[%s255 + $0x638] sm:$0xff]
        %v512 = vld [vmem:[%s255 + $0x640] sm:$0xff]
        %v513 = vld [vmem:[%s255 + $0x648] sm:$0xff]
        %v514 = vld [vmem:[%s255 + $0x650] sm:$0xff]
        %v515 = vld [vmem:[%s255 + $0x658] sm:$0xff]
        %v516 = vld [vmem:[%s255 + $0x660] sm:$0xff]
        %v517 = vld [vmem:[%s255 + $0x668] sm:$0xff]
        %v518 = vld [vmem:[%s255 + $0x670] sm:$0xff]
        %v519 = vld [vmem:[%s255 + $0x678] sm:$0xff]
        %v520 = vld [vmem:[%s255 + $0x680] sm:$0xff]
        %v521 = vld [vmem:[%s255 + $0x688] sm:$0xff]
        %v522 = vld [vmem:[%s255 + $0x690] sm:$0xff]
        %v523 = vld [vmem:[%s255 + $0x698] sm:$0xff]
        %v524 = vld [vmem:[%s255 + $0x6a0] sm:$0xff]
        %v525 = vld [vmem:[%s255 + $0x6a8] sm:$0xff]
        %v526 = vld [vmem:[%s255 + $0x6b0] sm:$0xff]
        %v527 = vld [vmem:[%s255 + $0x6b8] sm:$0xff]
        %v528 = vld [vmem:[%s255 + $0x6c0] sm:$0xff]
        %v529 = vld [vmem:[%s255 + $0x6c8] sm:$0xff]
        %v530 = vld [vmem:[%s255 + $0x6d0] sm:$0xff]
        %v531 = vld [vmem:[%s255 + $0x6d8] sm:$0xff]
        %v532 = vld [vmem:[%s255 + $0x6e0] sm:$0xff]
        %v533 = vld [vmem:[%s255 + $0x6e8] sm:$0xff]
        %v534 = vld [vmem:[%s255 + $0x6f0] sm:$0xff]
        %v535 = vld [vmem:[%s255 + $0x6f8] sm:$0xff]
        %v536 = vld [vmem:[%s255 + $0x700] sm:$0xff]
        %v537 = vld [vmem:[%s255 + $0x708] sm:$0xff]
        %v538 = vld [vmem:[%s255 + $0x710] sm:$0xff]
        %v539 = vld [vmem:[%s255 + $0x718] sm:$0xff]
        %v540 = vld [vmem:[%s255 + $0x720] sm:$0xff]
        %v541 = vld [vmem:[%s255 + $0x728] sm:$0xff]
        %v542 = vld [vmem:[%s255 + $0x730] sm:$0xff]
        %v543 = vld [vmem:[%s255 + $0x738] sm:$0xff]
        %v544 = vld [vmem:[%s255 + $0x740] sm:$0xff]
        %v545 = vld [vmem:[%s255 + $0x748] sm:$0xff]
        %v546 = vld [vmem:[%s255 + $0x750] sm:$0xff]
        %v547 = vld [vmem:[%s255 + $0x758] sm:$0xff]
        %v548 = vld [vmem:[%s255 + $0x760] sm:$0xff]
        %v549 = vld [vmem:[%s255 + $0x768] sm:$0xff]
        %v550 = vld [vmem:[%s255 + $0x770] sm:$0xff]
        %v551 = vld [vmem:[%s255 + $0x778] sm:$0xff]
        %v552 = vld [vmem:[%s255 + $0x780] sm:$0xff]
        %v553 = vld [vmem:[%s255 + $0x788] sm:$0xff]
        %v554 = vld [vmem:[%s255 + $0x790] sm:$0xff]
        %v555 = vld [vmem:[%s255 + $0x798] sm:$0xff]
        %v556 = vld [vmem:[%s255 + $0x7a0] sm:$0xff]
        %v557 = vld [vmem:[%s255 + $0x7a8] sm:$0xff]
        %v558 = vld [vmem:[%s255 + $0x7b0] sm:$0xff]
        %v559 = vld [vmem:[%s255 + $0x7b8] sm:$0xff]
        %v560 = vld [vmem:[%s255 + $0x7c0] sm:$0xff]
        %v561 = vld [vmem:[%s255 + $0x7c8] sm:$0xff]
        %v562 = vld [vmem:[%s255 + $0x7d0] sm:$0xff]
        %v563 = vld [vmem:[%s255 + $0x7d8] sm:$0xff]
        %v564 = vld [vmem:[%s255 + $0x7e0] sm:$0xff]
        %v565 = vld [vmem:[%s255 + $0x7e8] sm:$0xff]
        %v566 = vld [vmem:[%s255 + $0x7f0] sm:$0xff]
        %v567 = vld [vmem:[%s255 + $0x7f8] sm:$0xff]
        %v568 = vld [vmem:[%s255 + $0x800] sm:$0xff]
        %v569 = vld [vmem:[%s255 + $0x808] sm:$0xff]
        %v570 = vld [vmem:[%s255 + $0x810] sm:$0xff]
        %v571 = vld [vmem:[%s255 + $0x818] sm:$0xff]
        %v572 = vld [vmem:[%s255 + $0x820] sm:$0xff]
        %v573 = vld [vmem:[%s255 + $0x828] sm:$0xff]
        %v574 = vld [vmem:[%s255 + $0x830] sm:$0xff]
        %v575 = vld [vmem:[%s255 + $0x838] sm:$0xff]
        %v576 = vld [vmem:[%s255 + $0x840] sm:$0xff]
        %v577 = vld [vmem:[%s255 + $0x848] sm:$0xff]
        %v578 = vld [vmem:[%s255 + $0x850] sm:$0xff]
        %v579 = vld [vmem:[%s255 + $0x858] sm:$0xff]
        %v580 = vld [vmem:[%s255 + $0x860] sm:$0xff]
        %v581 = vld [vmem:[%s255 + $0x868] sm:$0xff]
        %v582 = vld [vmem:[%s255 + $0x870] sm:$0xff]
        %v583 = vld [vmem:[%s255 + $0x878] sm:$0xff]
        %v584 = vld [vmem:[%s255 + $0x880] sm:$0xff]
        %v585 = vld [vmem:[%s255 + $0x888] sm:$0xff]
        %v586 = vld [vmem:[%s255 + $0x890] sm:$0xff]
        %v587 = vld [vmem:[%s255 + $0x898] sm:$0xff]
        %v588 = vld [vmem:[%s255 + $0x8a0] sm:$0xff]
        %v589 = vld [vmem:[%s255 + $0x8a8] sm:$0xff]
        %v590 = vld [vmem:[%s255 + $0x8b0] sm:$0xff]
        %v591 = vld [vmem:[%s255 + $0x8b8] sm:$0xff]
        %v592 = vld [vmem:[%s255 + $0x8c0] sm:$0xff]
        %v593 = vld [vmem:[%s255 + $0x8c8] sm:$0xff]
        %v594 = vld [vmem:[%s255 + $0x8d0] sm:$0xff]
        %v595 = vld [vmem:[%s255 + $0x8d8] sm:$0xff]
        %v596 = vld [vmem:[%s255 + $0x8e0] sm:$0xff]
        %v597 = vld [vmem:[%s255 + $0x8e8] sm:$0xff]
        %v598 = vld [vmem:[%s255 + $0x8f0] sm:$0xff]
        %v599 = vld [vmem:[%s255 + $0x8f8] sm:$0xff]
        %v600 = vld [vmem:[%s255 + $0x900] sm:$0xff]
        %v601 = vld [vmem:[%s255 + $0x908] sm:$0xff]
        %v602 = vld [vmem:[%s255 + $0x910] sm:$0xff]
        %v603 = vld [vmem:[%s255 + $0x918] sm:$0xff]
        %v604 = vld [vmem:[%s255 + $0x920] sm:$0xff]
        %v605 = vld [vmem:[%s255 + $0x928] sm:$0xff]
        %v606 = vld [vmem:[%s255 + $0x930] sm:$0xff]
        %v607 = vld [vmem:[%s255 + $0x938] sm:$0xff]
        %v608 = vld [vmem:[%s255 + $0x940] sm:$0xff]
        %v609 = vld [vmem:[%s255 + $0x948] sm:$0xff]
        %v610 = vld [vmem:[%s255 + $0x950] sm:$0xff]
        %v611 = vld [vmem:[%s255 + $0x958] sm:$0xff]
        %v612 = vld [vmem:[%s255 + $0x960] sm:$0xff]
        %v613 = vld [vmem:[%s255 + $0x968] sm:$0xff]
        %v614 = vld [vmem:[%s255 + $0x970] sm:$0xff]
        %v615 = vld [vmem:[%s255 + $0x978] sm:$0xff]
        %v616 = vld [vmem:[%s255 + $0x980] sm:$0xff]
        %v617 = vld [vmem:[%s255 + $0x988] sm:$0xff]
        %v618 = vld [vmem:[%s255 + $0x990] sm:$0xff]
        %v619 = vld [vmem:[%s255 + $0x998] sm:$0xff]
        %v620 = vld [vmem:[%s255 + $0x9a0] sm:$0xff]
        %v621 = vld [vmem:[%s255 + $0x9a8] sm:$0xff]
        %v622 = vld [vmem:[%s255 + $0x9b0] sm:$0xff]
        %v623 = vld [vmem:[%s255 + $0x9b8] sm:$0xff]
        %v624 = vld [vmem:[%s255 + $0x9c0] sm:$0xff]
        %v625 = vld [vmem:[%s255 + $0x9c8] sm:$0xff]
        %v626 = vld [vmem:[%s255 + $0x9d0] sm:$0xff]
        %v627 = vld [vmem:[%s255 + $0x9d8] sm:$0xff]
        %v628 = vld [vmem:[%s255 + $0x9e0] sm:$0xff]
        %v629 = vld [vmem:[%s255 + $0x9e8] sm:$0xff]
        %v630 = vld [vmem:[%s255 + $0x9f0] sm:$0xff]
        %v631 = vld [vmem:[%s255 + $0x9f8] sm:$0xff]
        %v637 = vunpack.c.l.b16 %v307
        %v638 = vunpack.c.h.b16 %v307
        %v639 = vunpack.c.l.b16 %v308
        %v640 = vunpack.c.h.b16 %v308
        %v641 = vunpack.c.l.b16 %v309
        %v642 = vunpack.c.h.b16 %v309
        %v643 = vunpack.c.l.b16 %v310
        %v644 = vunpack.c.h.b16 %v310
        %v645 = vunpack.c.l.b16 %v311
        %v646 = vunpack.c.h.b16 %v311
        %v647 = vpack.c.b16 %v637, %v637
        %v648 = vpack.c.b16 %v638, %v638
        %v649 = vpack.c.b16 %v639, %v639
        %v650 = vpack.c.b16 %v640, %v640
        %v651 = vpack.c.b16 %v641, %v641
        %v652 = vpack.c.b16 %v642, %v642
        %v653 = vpack.c.b16 %v643, %v643
        %v654 = vpack.c.b16 %v644, %v644
        %v655 = vpack.c.b16 %v645, %v645
        %v656 = vpack.c.b16 %v646, %v646
        %v987 = vunpack.c.l.b16 %v312
        %v988 = vunpack.c.h.b16 %v312
        %v989 = vunpack.c.l.b16 %v313
        %v990 = vunpack.c.h.b16 %v313
        %v991 = vunpack.c.l.b16 %v314
        %v992 = vunpack.c.h.b16 %v314
        %v993 = vunpack.c.l.b16 %v315
        %v994 = vunpack.c.h.b16 %v315
        %v995 = vunpack.c.l.b16 %v316
        %v996 = vunpack.c.h.b16 %v316
        %v997 = vunpack.c.l.b16 %v317
        %v998 = vunpack.c.h.b16 %v317
        %v999 = vunpack.c.l.b16 %v318
        %v1000 = vunpack.c.h.b16 %v318
        %v1001 = vunpack.c.l.b16 %v319
        %v1002 = vunpack.c.h.b16 %v319
        %v1003 = vunpack.c.l.b16 %v320
        %v1004 = vunpack.c.h.b16 %v320
        %v1005 = vunpack.c.l.b16 %v321
        %v1006 = vunpack.c.h.b16 %v321
        %v1007 = vunpack.c.l.b16 %v322
        %v1008 = vunpack.c.h.b16 %v322
        %v1009 = vunpack.c.l.b16 %v323
        %v1010 = vunpack.c.h.b16 %v323
        %v1011 = vunpack.c.l.b16 %v324
        %v1012 = vunpack.c.h.b16 %v324
        %v1013 = vunpack.c.l.b16 %v325
        %v1014 = vunpack.c.h.b16 %v325
        %v1015 = vunpack.c.l.b16 %v326
        %v1016 = vunpack.c.h.b16 %v326
        %v1017 = vunpack.c.l.b16 %v327
        %v1018 = vunpack.c.h.b16 %v327
        %v1019 = vunpack.c.l.b16 %v328
        %v1020 = vunpack.c.h.b16 %v328
        %v1021 = vunpack.c.l.b16 %v329
        %v1022 = vunpack.c.h.b16 %v329
        %v1023 = vunpack.c.l.b16 %v330
        %v1024 = vunpack.c.h.b16 %v330
        %v1025 = vunpack.c.l.b16 %v331
        %v1026 = vunpack.c.h.b16 %v331
        %v1027 = vunpack.c.l.b16 %v332
        %v1028 = vunpack.c.h.b16 %v332
        %v1029 = vunpack.c.l.b16 %v333
        %v1030 = vunpack.c.h.b16 %v333
        %v1031 = vunpack.c.l.b16 %v334
        %v1032 = vunpack.c.h.b16 %v334
        %v1033 = vunpack.c.l.b16 %v335
        %v1034 = vunpack.c.h.b16 %v335
        %v1035 = vunpack.c.l.b16 %v336
        %v1036 = vunpack.c.h.b16 %v336
        %v1037 = vunpack.c.l.b16 %v337
        %v1038 = vunpack.c.h.b16 %v337
        %v1039 = vunpack.c.l.b16 %v338
        %v1040 = vunpack.c.h.b16 %v338
        %v1041 = vunpack.c.l.b16 %v339
        %v1042 = vunpack.c.h.b16 %v339
        %v1043 = vunpack.c.l.b16 %v340
        %v1044 = vunpack.c.h.b16 %v340
        %v1045 = vunpack.c.l.b16 %v341
        %v1046 = vunpack.c.h.b16 %v341
        %v1047 = vunpack.c.l.b16 %v342
        %v1048 = vunpack.c.h.b16 %v342
        %v1049 = vunpack.c.l.b16 %v343
        %v1050 = vunpack.c.h.b16 %v343
        %v1051 = vunpack.c.l.b16 %v344
        %v1052 = vunpack.c.h.b16 %v344
        %v1053 = vunpack.c.l.b16 %v345
        %v1054 = vunpack.c.h.b16 %v345
        %v1055 = vunpack.c.l.b16 %v346
        %v1056 = vunpack.c.h.b16 %v346
        %v1057 = vunpack.c.l.b16 %v347
        %v1058 = vunpack.c.h.b16 %v347
        %v1059 = vunpack.c.l.b16 %v348
        %v1060 = vunpack.c.h.b16 %v348
        %v1061 = vunpack.c.l.b16 %v349
        %v1062 = vunpack.c.h.b16 %v349
        %v1063 = vunpack.c.l.b16 %v350
        %v1064 = vunpack.c.h.b16 %v350
        %v1065 = vunpack.c.l.b16 %v351
        %v1066 = vunpack.c.h.b16 %v351
        %v1067 = vunpack.c.l.b16 %v352
        %v1068 = vunpack.c.h.b16 %v352
        %v1069 = vunpack.c.l.b16 %v353
        %v1070 = vunpack.c.h.b16 %v353
        %v1071 = vunpack.c.l.b16 %v354
        %v1072 = vunpack.c.h.b16 %v354
        %v1073 = vunpack.c.l.b16 %v355
        %v1074 = vunpack.c.h.b16 %v355
        %v1075 = vunpack.c.l.b16 %v356
        %v1076 = vunpack.c.h.b16 %v356
        %v1077 = vunpack.c.l.b16 %v357
        %v1078 = vunpack.c.h.b16 %v357
        %v1079 = vunpack.c.l.b16 %v358
        %v1080 = vunpack.c.h.b16 %v358
        %v1081 = vunpack.c.l.b16 %v359
        %v1082 = vunpack.c.h.b16 %v359
        %v1083 = vunpack.c.l.b16 %v360
        %v1084 = vunpack.c.h.b16 %v360
        %v1085 = vunpack.c.l.b16 %v361
        %v1086 = vunpack.c.h.b16 %v361
        %v1087 = vunpack.c.l.b16 %v362
        %v1088 = vunpack.c.h.b16 %v362
        %v1089 = vunpack.c.l.b16 %v363
        %v1090 = vunpack.c.h.b16 %v363
        %v1091 = vunpack.c.l.b16 %v364
        %v1092 = vunpack.c.h.b16 %v364
        %v1093 = vunpack.c.l.b16 %v365
        %v1094 = vunpack.c.h.b16 %v365
        %v1095 = vunpack.c.l.b16 %v366
        %v1096 = vunpack.c.h.b16 %v366
        %v1097 = vunpack.c.l.b16 %v367
        %v1098 = vunpack.c.h.b16 %v367
        %v1099 = vunpack.c.l.b16 %v368
        %v1100 = vunpack.c.h.b16 %v368
        %v1101 = vunpack.c.l.b16 %v369
        %v1102 = vunpack.c.h.b16 %v369
        %v1103 = vunpack.c.l.b16 %v370
        %v1104 = vunpack.c.h.b16 %v370
        %v1105 = vunpack.c.l.b16 %v371
        %v1106 = vunpack.c.h.b16 %v371
        %v1107 = vunpack.c.l.b16 %v372
        %v1108 = vunpack.c.h.b16 %v372
        %v1109 = vunpack.c.l.b16 %v373
        %v1110 = vunpack.c.h.b16 %v373
        %v1111 = vunpack.c.l.b16 %v374
        %v1112 = vunpack.c.h.b16 %v374
        %v1113 = vunpack.c.l.b16 %v375
        %v1114 = vunpack.c.h.b16 %v375
        %v1115 = vunpack.c.l.b16 %v376
        %v1116 = vunpack.c.h.b16 %v376
        %v1117 = vunpack.c.l.b16 %v377
        %v1118 = vunpack.c.h.b16 %v377
        %v1119 = vunpack.c.l.b16 %v378
        %v1120 = vunpack.c.h.b16 %v378
        %v1121 = vunpack.c.l.b16 %v379
        %v1122 = vunpack.c.h.b16 %v379
        %v1123 = vunpack.c.l.b16 %v380
        %v1124 = vunpack.c.h.b16 %v380
        %v1125 = vunpack.c.l.b16 %v381
        %v1126 = vunpack.c.h.b16 %v381
        %v1127 = vunpack.c.l.b16 %v382
        %v1128 = vunpack.c.h.b16 %v382
        %v1129 = vunpack.c.l.b16 %v383
        %v1130 = vunpack.c.h.b16 %v383
        %v1131 = vunpack.c.l.b16 %v384
        %v1132 = vunpack.c.h.b16 %v384
        %v1133 = vunpack.c.l.b16 %v385
        %v1134 = vunpack.c.h.b16 %v385
        %v1135 = vunpack.c.l.b16 %v386
        %v1136 = vunpack.c.h.b16 %v386
        %v1137 = vunpack.c.l.b16 %v387
        %v1138 = vunpack.c.h.b16 %v387
        %v1139 = vunpack.c.l.b16 %v388
        %v1140 = vunpack.c.h.b16 %v388
        %v1141 = vunpack.c.l.b16 %v389
        %v1142 = vunpack.c.h.b16 %v389
        %v1143 = vunpack.c.l.b16 %v390
        %v1144 = vunpack.c.h.b16 %v390
        %v1145 = vunpack.c.l.b16 %v391
        %v1146 = vunpack.c.h.b16 %v391
        %v1147 = vunpack.c.l.b16 %v392
        %v1148 = vunpack.c.h.b16 %v392
        %v1149 = vunpack.c.l.b16 %v393
        %v1150 = vunpack.c.h.b16 %v393
        %v1151 = vunpack.c.l.b16 %v394
        %v1152 = vunpack.c.h.b16 %v394
        %v1153 = vunpack.c.l.b16 %v395
        %v1154 = vunpack.c.h.b16 %v395
        %v1155 = vunpack.c.l.b16 %v396
        %v1156 = vunpack.c.h.b16 %v396
        %v1157 = vunpack.c.l.b16 %v397
        %v1158 = vunpack.c.h.b16 %v397
        %v1159 = vunpack.c.l.b16 %v398
        %v1160 = vunpack.c.h.b16 %v398
        %v1161 = vunpack.c.l.b16 %v399
        %v1162 = vunpack.c.h.b16 %v399
        %v1163 = vunpack.c.l.b16 %v400
        %v1164 = vunpack.c.h.b16 %v400
        %v1165 = vunpack.c.l.b16 %v401
        %v1166 = vunpack.c.h.b16 %v401
        %v1167 = vunpack.c.l.b16 %v402
        %v1168 = vunpack.c.h.b16 %v402
        %v1169 = vunpack.c.l.b16 %v403
        %v1170 = vunpack.c.h.b16 %v403
        %v1171 = vunpack.c.l.b16 %v404
        %v1172 = vunpack.c.h.b16 %v404
        %v1173 = vunpack.c.l.b16 %v405
        %v1174 = vunpack.c.h.b16 %v405
        %v1175 = vunpack.c.l.b16 %v406
        %v1176 = vunpack.c.h.b16 %v406
        %v1177 = vunpack.c.l.b16 %v407
        %v1178 = vunpack.c.h.b16 %v407
        %v1179 = vunpack.c.l.b16 %v408
        %v1180 = vunpack.c.h.b16 %v408
        %v1181 = vunpack.c.l.b16 %v409
        %v1182 = vunpack.c.h.b16 %v409
        %v1183 = vunpack.c.l.b16 %v410
        %v1184 = vunpack.c.h.b16 %v410
        %v1185 = vunpack.c.l.b16 %v411
        %v1186 = vunpack.c.h.b16 %v411
        %v1187 = vunpack.c.l.b16 %v412
        %v1188 = vunpack.c.h.b16 %v412
        %v1189 = vunpack.c.l.b16 %v413
        %v1190 = vunpack.c.h.b16 %v413
        %v1191 = vunpack.c.l.b16 %v414
        %v1192 = vunpack.c.h.b16 %v414
        %v1193 = vunpack.c.l.b16 %v415
        %v1194 = vunpack.c.h.b16 %v415
        %v1195 = vunpack.c.l.b16 %v416
        %v1196 = vunpack.c.h.b16 %v416
        %v1197 = vunpack.c.l.b16 %v417
        %v1198 = vunpack.c.h.b16 %v417
        %v1199 = vunpack.c.l.b16 %v418
        %v1200 = vunpack.c.h.b16 %v418
        %v1201 = vunpack.c.l.b16 %v419
        %v1202 = vunpack.c.h.b16 %v419
        %v1203 = vunpack.c.l.b16 %v420
        %v1204 = vunpack.c.h.b16 %v420
        %v1205 = vunpack.c.l.b16 %v421
        %v1206 = vunpack.c.h.b16 %v421
        %v1207 = vunpack.c.l.b16 %v422
        %v1208 = vunpack.c.h.b16 %v422
        %v1209 = vunpack.c.l.b16 %v423
        %v1210 = vunpack.c.h.b16 %v423
        %v1211 = vunpack.c.l.b16 %v424
        %v1212 = vunpack.c.h.b16 %v424
        %v1213 = vunpack.c.l.b16 %v425
        %v1214 = vunpack.c.h.b16 %v425
        %v1215 = vunpack.c.l.b16 %v426
        %v1216 = vunpack.c.h.b16 %v426
        %v1217 = vunpack.c.l.b16 %v427
        %v1218 = vunpack.c.h.b16 %v427
        %v1219 = vunpack.c.l.b16 %v428
        %v1220 = vunpack.c.h.b16 %v428
        %v1221 = vunpack.c.l.b16 %v429
        %v1222 = vunpack.c.h.b16 %v429
        %v1223 = vunpack.c.l.b16 %v430
        %v1224 = vunpack.c.h.b16 %v430
        %v1225 = vunpack.c.l.b16 %v431
        %v1226 = vunpack.c.h.b16 %v431
        %v1227 = vunpack.c.l.b16 %v432
        %v1228 = vunpack.c.h.b16 %v432
        %v1229 = vunpack.c.l.b16 %v433
        %v1230 = vunpack.c.h.b16 %v433
        %v1231 = vunpack.c.l.b16 %v434
        %v1232 = vunpack.c.h.b16 %v434
        %v1233 = vunpack.c.l.b16 %v435
        %v1234 = vunpack.c.h.b16 %v435
        %v1235 = vunpack.c.l.b16 %v436
        %v1236 = vunpack.c.h.b16 %v436
        %v1237 = vunpack.c.l.b16 %v437
        %v1238 = vunpack.c.h.b16 %v437
        %v1239 = vunpack.c.l.b16 %v438
        %v1240 = vunpack.c.h.b16 %v438
        %v1241 = vunpack.c.l.b16 %v439
        %v1242 = vunpack.c.h.b16 %v439
        %v1243 = vunpack.c.l.b16 %v440
        %v1244 = vunpack.c.h.b16 %v440
        %v1245 = vunpack.c.l.b16 %v441
        %v1246 = vunpack.c.h.b16 %v441
        %v1247 = vunpack.c.l.b16 %v442
        %v1248 = vunpack.c.h.b16 %v442
        %v1249 = vunpack.c.l.b16 %v443
        %v1250 = vunpack.c.h.b16 %v443
        %v1251 = vunpack.c.l.b16 %v444
        %v1252 = vunpack.c.h.b16 %v444
        %v1253 = vunpack.c.l.b16 %v445
        %v1254 = vunpack.c.h.b16 %v445
        %v1255 = vunpack.c.l.b16 %v446
        %v1256 = vunpack.c.h.b16 %v446
        %v1257 = vunpack.c.l.b16 %v447
        %v1258 = vunpack.c.h.b16 %v447
        %v1259 = vunpack.c.l.b16 %v448
        %v1260 = vunpack.c.h.b16 %v448
        %v1261 = vunpack.c.l.b16 %v449
        %v1262 = vunpack.c.h.b16 %v449
        %v1263 = vunpack.c.l.b16 %v450
        %v1264 = vunpack.c.h.b16 %v450
        %v1265 = vunpack.c.l.b16 %v451
        %v1266 = vunpack.c.h.b16 %v451
        %v1267 = vunpack.c.l.b16 %v452
        %v1268 = vunpack.c.h.b16 %v452
        %v1269 = vunpack.c.l.b16 %v453
        %v1270 = vunpack.c.h.b16 %v453
        %v1271 = vunpack.c.l.b16 %v454
        %v1272 = vunpack.c.h.b16 %v454
        %v1273 = vunpack.c.l.b16 %v455
        %v1274 = vunpack.c.h.b16 %v455
        %v1275 = vunpack.c.l.b16 %v456
        %v1276 = vunpack.c.h.b16 %v456
        %v1277 = vunpack.c.l.b16 %v457
        %v1278 = vunpack.c.h.b16 %v457
        %v1279 = vunpack.c.l.b16 %v458
        %v1280 = vunpack.c.h.b16 %v458
        %v1281 = vunpack.c.l.b16 %v459
        %v1282 = vunpack.c.h.b16 %v459
        %v1283 = vunpack.c.l.b16 %v460
        %v1284 = vunpack.c.h.b16 %v460
        %v1285 = vunpack.c.l.b16 %v461
        %v1286 = vunpack.c.h.b16 %v461
        %v1287 = vunpack.c.l.b16 %v462
        %v1288 = vunpack.c.h.b16 %v462
        %v1289 = vunpack.c.l.b16 %v463
        %v1290 = vunpack.c.h.b16 %v463
        %v1291 = vunpack.c.l.b16 %v464
        %v1292 = vunpack.c.h.b16 %v464
        %v1293 = vunpack.c.l.b16 %v465
        %v1294 = vunpack.c.h.b16 %v465
        %v1295 = vunpack.c.l.b16 %v466
        %v1296 = vunpack.c.h.b16 %v466
        %v1297 = vunpack.c.l.b16 %v467
        %v1298 = vunpack.c.h.b16 %v467
        %v1299 = vunpack.c.l.b16 %v468
        %v1300 = vunpack.c.h.b16 %v468
        %v1301 = vunpack.c.l.b16 %v469
        %v1302 = vunpack.c.h.b16 %v469
        %v1303 = vunpack.c.l.b16 %v470
        %v1304 = vunpack.c.h.b16 %v470
        %v1305 = vunpack.c.l.b16 %v471
        %v1306 = vunpack.c.h.b16 %v471
        %v1307 = vunpack.c.l.b16 %v472
        %v1308 = vunpack.c.h.b16 %v472
        %v1309 = vunpack.c.l.b16 %v473
        %v1310 = vunpack.c.h.b16 %v473
        %v1311 = vunpack.c.l.b16 %v474
        %v1312 = vunpack.c.h.b16 %v474
        %v1313 = vunpack.c.l.b16 %v475
        %v1314 = vunpack.c.h.b16 %v475
        %v1315 = vunpack.c.l.b16 %v476
        %v1316 = vunpack.c.h.b16 %v476
        %v1317 = vunpack.c.l.b16 %v477
        %v1318 = vunpack.c.h.b16 %v477
        %v1319 = vunpack.c.l.b16 %v478
        %v1320 = vunpack.c.h.b16 %v478
        %v1321 = vunpack.c.l.b16 %v479
        %v1322 = vunpack.c.h.b16 %v479
        %v1323 = vunpack.c.l.b16 %v480
        %v1324 = vunpack.c.h.b16 %v480
        %v1325 = vunpack.c.l.b16 %v481
        %v1326 = vunpack.c.h.b16 %v481
        %v1327 = vunpack.c.l.b16 %v482
        %v1328 = vunpack.c.h.b16 %v482
        %v1329 = vunpack.c.l.b16 %v483
        %v1330 = vunpack.c.h.b16 %v483
        %v1331 = vunpack.c.l.b16 %v484
        %v1332 = vunpack.c.h.b16 %v484
        %v1333 = vunpack.c.l.b16 %v485
        %v1334 = vunpack.c.h.b16 %v485
        %v1335 = vunpack.c.l.b16 %v486
        %v1336 = vunpack.c.h.b16 %v486
        %v1337 = vunpack.c.l.b16 %v487
        %v1338 = vunpack.c.h.b16 %v487
        %v1339 = vunpack.c.l.b16 %v488
        %v1340 = vunpack.c.h.b16 %v488
        %v1341 = vunpack.c.l.b16 %v489
        %v1342 = vunpack.c.h.b16 %v489
        %v1343 = vunpack.c.l.b16 %v490
        %v1344 = vunpack.c.h.b16 %v490
        %v1345 = vunpack.c.l.b16 %v491
        %v1346 = vunpack.c.h.b16 %v491
        %v1347 = vunpack.c.l.b16 %v492
        %v1348 = vunpack.c.h.b16 %v492
        %v1349 = vunpack.c.l.b16 %v493
        %v1350 = vunpack.c.h.b16 %v493
        %v1351 = vunpack.c.l.b16 %v494
        %v1352 = vunpack.c.h.b16 %v494
        %v1353 = vunpack.c.l.b16 %v495
        %v1354 = vunpack.c.h.b16 %v495
        %v1355 = vunpack.c.l.b16 %v496
        %v1356 = vunpack.c.h.b16 %v496
        %v1357 = vunpack.c.l.b16 %v497
        %v1358 = vunpack.c.h.b16 %v497
        %v1359 = vunpack.c.l.b16 %v498
        %v1360 = vunpack.c.h.b16 %v498
        %v1361 = vunpack.c.l.b16 %v499
        %v1362 = vunpack.c.h.b16 %v499
        %v1363 = vunpack.c.l.b16 %v500
        %v1364 = vunpack.c.h.b16 %v500
        %v1365 = vunpack.c.l.b16 %v501
        %v1366 = vunpack.c.h.b16 %v501
        %v1367 = vunpack.c.l.b16 %v502
        %v1368 = vunpack.c.h.b16 %v502
        %v1369 = vunpack.c.l.b16 %v503
        %v1370 = vunpack.c.h.b16 %v503
        %v1371 = vunpack.c.l.b16 %v504
        %v1372 = vunpack.c.h.b16 %v504
        %v1373 = vunpack.c.l.b16 %v505
        %v1374 = vunpack.c.h.b16 %v505
        %v1375 = vunpack.c.l.b16 %v506
        %v1376 = vunpack.c.h.b16 %v506
        %v1377 = vunpack.c.l.b16 %v507
        %v1378 = vunpack.c.h.b16 %v507
        %v1379 = vunpack.c.l.b16 %v508
        %v1380 = vunpack.c.h.b16 %v508
        %v1381 = vunpack.c.l.b16 %v509
        %v1382 = vunpack.c.h.b16 %v509
        %v1383 = vunpack.c.l.b16 %v510
        %v1384 = vunpack.c.h.b16 %v510
        %v1385 = vunpack.c.l.b16 %v511
        %v1386 = vunpack.c.h.b16 %v511
        %v1387 = vunpack.c.l.b16 %v512
        %v1388 = vunpack.c.h.b16 %v512
        %v1389 = vunpack.c.l.b16 %v513
        %v1390 = vunpack.c.h.b16 %v513
        %v1391 = vunpack.c.l.b16 %v514
        %v1392 = vunpack.c.h.b16 %v514
        %v1393 = vunpack.c.l.b16 %v515
        %v1394 = vunpack.c.h.b16 %v515
        %v1395 = vunpack.c.l.b16 %v516
        %v1396 = vunpack.c.h.b16 %v516
        %v1397 = vunpack.c.l.b16 %v517
        %v1398 = vunpack.c.h.b16 %v517
        %v1399 = vunpack.c.l.b16 %v518
        %v1400 = vunpack.c.h.b16 %v518
        %v1401 = vunpack.c.l.b16 %v519
        %v1402 = vunpack.c.h.b16 %v519
        %v1403 = vunpack.c.l.b16 %v520
        %v1404 = vunpack.c.h.b16 %v520
        %v1405 = vunpack.c.l.b16 %v521
        %v1406 = vunpack.c.h.b16 %v521
        %v1407 = vunpack.c.l.b16 %v522
        %v1408 = vunpack.c.h.b16 %v522
        %v1409 = vunpack.c.l.b16 %v523
        %v1410 = vunpack.c.h.b16 %v523
        %v1411 = vunpack.c.l.b16 %v524
        %v1412 = vunpack.c.h.b16 %v524
        %v1413 = vunpack.c.l.b16 %v525
        %v1414 = vunpack.c.h.b16 %v525
        %v1415 = vunpack.c.l.b16 %v526
        %v1416 = vunpack.c.h.b16 %v526
        %v1417 = vunpack.c.l.b16 %v527
        %v1418 = vunpack.c.h.b16 %v527
        %v1419 = vunpack.c.l.b16 %v528
        %v1420 = vunpack.c.h.b16 %v528
        %v1421 = vunpack.c.l.b16 %v529
        %v1422 = vunpack.c.h.b16 %v529
        %v1423 = vunpack.c.l.b16 %v530
        %v1424 = vunpack.c.h.b16 %v530
        %v1425 = vunpack.c.l.b16 %v531
        %v1426 = vunpack.c.h.b16 %v531
        %v1427 = vunpack.c.l.b16 %v532
        %v1428 = vunpack.c.h.b16 %v532
        %v1429 = vunpack.c.l.b16 %v533
        %v1430 = vunpack.c.h.b16 %v533
        %v1431 = vunpack.c.l.b16 %v534
        %v1432 = vunpack.c.h.b16 %v534
        %v1433 = vunpack.c.l.b16 %v535
        %v1434 = vunpack.c.h.b16 %v535
        %v1435 = vunpack.c.l.b16 %v536
        %v1436 = vunpack.c.h.b16 %v536
        %v1437 = vunpack.c.l.b16 %v537
        %v1438 = vunpack.c.h.b16 %v537
        %v1439 = vunpack.c.l.b16 %v538
        %v1440 = vunpack.c.h.b16 %v538
        %v1441 = vunpack.c.l.b16 %v539
        %v1442 = vunpack.c.h.b16 %v539
        %v1443 = vunpack.c.l.b16 %v540
        %v1444 = vunpack.c.h.b16 %v540
        %v1445 = vunpack.c.l.b16 %v541
        %v1446 = vunpack.c.h.b16 %v541
        %v1447 = vunpack.c.l.b16 %v542
        %v1448 = vunpack.c.h.b16 %v542
        %v1449 = vunpack.c.l.b16 %v543
        %v1450 = vunpack.c.h.b16 %v543
        %v1451 = vunpack.c.l.b16 %v544
        %v1452 = vunpack.c.h.b16 %v544
        %v1453 = vunpack.c.l.b16 %v545
        %v1454 = vunpack.c.h.b16 %v545
        %v1455 = vunpack.c.l.b16 %v546
        %v1456 = vunpack.c.h.b16 %v546
        %v1457 = vunpack.c.l.b16 %v547
        %v1458 = vunpack.c.h.b16 %v547
        %v1459 = vunpack.c.l.b16 %v548
        %v1460 = vunpack.c.h.b16 %v548
        %v1461 = vunpack.c.l.b16 %v549
        %v1462 = vunpack.c.h.b16 %v549
        %v1463 = vunpack.c.l.b16 %v550
        %v1464 = vunpack.c.h.b16 %v550
        %v1465 = vunpack.c.l.b16 %v551
        %v1466 = vunpack.c.h.b16 %v551
        %v1467 = vunpack.c.l.b16 %v552
        %v1468 = vunpack.c.h.b16 %v552
        %v1469 = vunpack.c.l.b16 %v553
        %v1470 = vunpack.c.h.b16 %v553
        %v1471 = vunpack.c.l.b16 %v554
        %v1472 = vunpack.c.h.b16 %v554
        %v1473 = vunpack.c.l.b16 %v555
        %v1474 = vunpack.c.h.b16 %v555
        %v1475 = vunpack.c.l.b16 %v556
        %v1476 = vunpack.c.h.b16 %v556
        %v1477 = vunpack.c.l.b16 %v557
        %v1478 = vunpack.c.h.b16 %v557
        %v1479 = vunpack.c.l.b16 %v558
        %v1480 = vunpack.c.h.b16 %v558
        %v1481 = vunpack.c.l.b16 %v559
        %v1482 = vunpack.c.h.b16 %v559
        %v1483 = vunpack.c.l.b16 %v560
        %v1484 = vunpack.c.h.b16 %v560
        %v1485 = vunpack.c.l.b16 %v561
        %v1486 = vunpack.c.h.b16 %v561
        %v1487 = vunpack.c.l.b16 %v562
        %v1488 = vunpack.c.h.b16 %v562
        %v1489 = vunpack.c.l.b16 %v563
        %v1490 = vunpack.c.h.b16 %v563
        %v1491 = vunpack.c.l.b16 %v564
        %v1492 = vunpack.c.h.b16 %v564
        %v1493 = vunpack.c.l.b16 %v565
        %v1494 = vunpack.c.h.b16 %v565
        %v1495 = vunpack.c.l.b16 %v566
        %v1496 = vunpack.c.h.b16 %v566
        %v1497 = vunpack.c.l.b16 %v567
        %v1498 = vunpack.c.h.b16 %v567
        %v1499 = vunpack.c.l.b16 %v568
        %v1500 = vunpack.c.h.b16 %v568
        %v1501 = vunpack.c.l.b16 %v569
        %v1502 = vunpack.c.h.b16 %v569
        %v1503 = vunpack.c.l.b16 %v570
        %v1504 = vunpack.c.h.b16 %v570
        %v1505 = vunpack.c.l.b16 %v571
        %v1506 = vunpack.c.h.b16 %v571
        %v1507 = vunpack.c.l.b16 %v572
        %v1508 = vunpack.c.h.b16 %v572
        %v1509 = vunpack.c.l.b16 %v573
        %v1510 = vunpack.c.h.b16 %v573
        %v1511 = vunpack.c.l.b16 %v574
        %v1512 = vunpack.c.h.b16 %v574
        %v1513 = vunpack.c.l.b16 %v575
        %v1514 = vunpack.c.h.b16 %v575
        %v1515 = vunpack.c.l.b16 %v576
        %v1516 = vunpack.c.h.b16 %v576
        %v1517 = vunpack.c.l.b16 %v577
        %v1518 = vunpack.c.h.b16 %v577
        %v1519 = vunpack.c.l.b16 %v578
        %v1520 = vunpack.c.h.b16 %v578
        %v1521 = vunpack.c.l.b16 %v579
        %v1522 = vunpack.c.h.b16 %v579
        %v1523 = vunpack.c.l.b16 %v580
        %v1524 = vunpack.c.h.b16 %v580
        %v1525 = vunpack.c.l.b16 %v581
        %v1526 = vunpack.c.h.b16 %v581
        %v1527 = vunpack.c.l.b16 %v582
        %v1528 = vunpack.c.h.b16 %v582
        %v1529 = vunpack.c.l.b16 %v583
        %v1530 = vunpack.c.h.b16 %v583
        %v1531 = vunpack.c.l.b16 %v584
        %v1532 = vunpack.c.h.b16 %v584
        %v1533 = vunpack.c.l.b16 %v585
        %v1534 = vunpack.c.h.b16 %v585
        %v1535 = vunpack.c.l.b16 %v586
        %v1536 = vunpack.c.h.b16 %v586
        %v1537 = vunpack.c.l.b16 %v587
        %v1538 = vunpack.c.h.b16 %v587
        %v1539 = vunpack.c.l.b16 %v588
        %v1540 = vunpack.c.h.b16 %v588
        %v1541 = vunpack.c.l.b16 %v589
        %v1542 = vunpack.c.h.b16 %v589
        %v1543 = vunpack.c.l.b16 %v590
        %v1544 = vunpack.c.h.b16 %v590
        %v1545 = vunpack.c.l.b16 %v591
        %v1546 = vunpack.c.h.b16 %v591
        %v1547 = vunpack.c.l.b16 %v592
        %v1548 = vunpack.c.h.b16 %v592
        %v1549 = vunpack.c.l.b16 %v593
        %v1550 = vunpack.c.h.b16 %v593
        %v1551 = vunpack.c.l.b16 %v594
        %v1552 = vunpack.c.h.b16 %v594
        %v1553 = vunpack.c.l.b16 %v595
        %v1554 = vunpack.c.h.b16 %v595
        %v1555 = vunpack.c.l.b16 %v596
        %v1556 = vunpack.c.h.b16 %v596
        %v1557 = vunpack.c.l.b16 %v597
        %v1558 = vunpack.c.h.b16 %v597
        %v1559 = vunpack.c.l.b16 %v598
        %v1560 = vunpack.c.h.b16 %v598
        %v1561 = vunpack.c.l.b16 %v599
        %v1562 = vunpack.c.h.b16 %v599
        %v1563 = vunpack.c.l.b16 %v600
        %v1564 = vunpack.c.h.b16 %v600
        %v1565 = vunpack.c.l.b16 %v601
        %v1566 = vunpack.c.h.b16 %v601
        %v1567 = vunpack.c.l.b16 %v602
        %v1568 = vunpack.c.h.b16 %v602
        %v1569 = vunpack.c.l.b16 %v603
        %v1570 = vunpack.c.h.b16 %v603
        %v1571 = vunpack.c.l.b16 %v604
        %v1572 = vunpack.c.h.b16 %v604
        %v1573 = vunpack.c.l.b16 %v605
        %v1574 = vunpack.c.h.b16 %v605
        %v1575 = vunpack.c.l.b16 %v606
        %v1576 = vunpack.c.h.b16 %v606
        %v1577 = vunpack.c.l.b16 %v607
        %v1578 = vunpack.c.h.b16 %v607
        %v1579 = vunpack.c.l.b16 %v608
        %v1580 = vunpack.c.h.b16 %v608
        %v1581 = vunpack.c.l.b16 %v609
        %v1582 = vunpack.c.h.b16 %v609
        %v1583 = vunpack.c.l.b16 %v610
        %v1584 = vunpack.c.h.b16 %v610
        %v1585 = vunpack.c.l.b16 %v611
        %v1586 = vunpack.c.h.b16 %v611
        %v1587 = vunpack.c.l.b16 %v612
        %v1588 = vunpack.c.h.b16 %v612
        %v1589 = vunpack.c.l.b16 %v613
        %v1590 = vunpack.c.h.b16 %v613
        %v1591 = vunpack.c.l.b16 %v614
        %v1592 = vunpack.c.h.b16 %v614
        %v1593 = vunpack.c.l.b16 %v615
        %v1594 = vunpack.c.h.b16 %v615
        %v1595 = vunpack.c.l.b16 %v616
        %v1596 = vunpack.c.h.b16 %v616
        %v1597 = vunpack.c.l.b16 %v617
        %v1598 = vunpack.c.h.b16 %v617
        %v1599 = vunpack.c.l.b16 %v618
        %v1600 = vunpack.c.h.b16 %v618
        %v1601 = vunpack.c.l.b16 %v619
        %v1602 = vunpack.c.h.b16 %v619
        %v1603 = vunpack.c.l.b16 %v620
        %v1604 = vunpack.c.h.b16 %v620
        %v1605 = vunpack.c.l.b16 %v621
        %v1606 = vunpack.c.h.b16 %v621
        %v1607 = vunpack.c.l.b16 %v622
        %v1608 = vunpack.c.h.b16 %v622
        %v1609 = vunpack.c.l.b16 %v623
        %v1610 = vunpack.c.h.b16 %v623
        %v1611 = vunpack.c.l.b16 %v624
        %v1612 = vunpack.c.h.b16 %v624
        %v1613 = vunpack.c.l.b16 %v625
        %v1614 = vunpack.c.h.b16 %v625
        %v1615 = vunpack.c.l.b16 %v626
        %v1616 = vunpack.c.h.b16 %v626
        %v1617 = vunpack.c.l.b16 %v627
        %v1618 = vunpack.c.h.b16 %v627
        %v1619 = vunpack.c.l.b16 %v628
        %v1620 = vunpack.c.h.b16 %v628
        %v1621 = vunpack.c.l.b16 %v629
        %v1622 = vunpack.c.h.b16 %v629
        %v1623 = vunpack.c.l.b16 %v630
        %v1624 = vunpack.c.h.b16 %v630
        %v1625 = vunpack.c.l.b16 %v631
        %v1626 = vunpack.c.h.b16 %v631
        %v1627 = vpack.c.b16 %v991, %v987
        %v1628 = vpack.c.b16 %v992, %v988
        %v1629 = vpack.c.b16 %v993, %v989
        %v1630 = vpack.c.b16 %v994, %v990
        %v1631 = vpack.c.b16 %v999, %v995
        %v1632 = vpack.c.b16 %v1000, %v996
        %v1633 = vpack.c.b16 %v1001, %v997
        %v1634 = vpack.c.b16 %v1002, %v998
        %v1635 = vpack.c.b16 %v1007, %v1003
        %v1636 = vpack.c.b16 %v1008, %v1004
        %v1637 = vpack.c.b16 %v1009, %v1005
        %v1638 = vpack.c.b16 %v1010, %v1006
        %v1639 = vpack.c.b16 %v1015, %v1011
        %v1640 = vpack.c.b16 %v1016, %v1012
        %v1641 = vpack.c.b16 %v1017, %v1013
        %v1642 = vpack.c.b16 %v1018, %v1014
        %v1643 = vpack.c.b16 %v1023, %v1019
        %v1644 = vpack.c.b16 %v1024, %v1020
        %v1645 = vpack.c.b16 %v1025, %v1021
        %v1646 = vpack.c.b16 %v1026, %v1022
        %v1647 = vpack.c.b16 %v1031, %v1027
        %v1648 = vpack.c.b16 %v1032, %v1028
        %v1649 = vpack.c.b16 %v1033, %v1029
        %v1650 = vpack.c.b16 %v1034, %v1030
        %v1651 = vpack.c.b16 %v1039, %v1035
        %v1652 = vpack.c.b16 %v1040, %v1036
        %v1653 = vpack.c.b16 %v1041, %v1037
        %v1654 = vpack.c.b16 %v1042, %v1038
        %v1655 = vpack.c.b16 %v1047, %v1043
        %v1656 = vpack.c.b16 %v1048, %v1044
        %v1657 = vpack.c.b16 %v1049, %v1045
        %v1658 = vpack.c.b16 %v1050, %v1046
        %v1659 = vpack.c.b16 %v1055, %v1051
        %v1660 = vpack.c.b16 %v1056, %v1052
        %v1661 = vpack.c.b16 %v1057, %v1053
        %v1662 = vpack.c.b16 %v1058, %v1054
        %v1663 = vpack.c.b16 %v1063, %v1059
        %v1664 = vpack.c.b16 %v1064, %v1060
        %v1665 = vpack.c.b16 %v1065, %v1061
        %v1666 = vpack.c.b16 %v1066, %v1062
        %v1667 = vpack.c.b16 %v1071, %v1067
        %v1668 = vpack.c.b16 %v1072, %v1068
        %v1669 = vpack.c.b16 %v1073, %v1069
        %v1670 = vpack.c.b16 %v1074, %v1070
        %v1671 = vpack.c.b16 %v1079, %v1075
        %v1672 = vpack.c.b16 %v1080, %v1076
        %v1673 = vpack.c.b16 %v1081, %v1077
        %v1674 = vpack.c.b16 %v1082, %v1078
        %v1675 = vpack.c.b16 %v1087, %v1083
        %v1676 = vpack.c.b16 %v1088, %v1084
        %v1677 = vpack.c.b16 %v1089, %v1085
        %v1678 = vpack.c.b16 %v1090, %v1086
        %v1679 = vpack.c.b16 %v1095, %v1091
        %v1680 = vpack.c.b16 %v1096, %v1092
        %v1681 = vpack.c.b16 %v1097, %v1093
        %v1682 = vpack.c.b16 %v1098, %v1094
        %v1683 = vpack.c.b16 %v1103, %v1099
        %v1684 = vpack.c.b16 %v1104, %v1100
        %v1685 = vpack.c.b16 %v1105, %v1101
        %v1686 = vpack.c.b16 %v1106, %v1102
        %v1687 = vpack.c.b16 %v1111, %v1107
        %v1688 = vpack.c.b16 %v1112, %v1108
        %v1689 = vpack.c.b16 %v1113, %v1109
        %v1690 = vpack.c.b16 %v1114, %v1110
        %v1691 = vpack.c.b16 %v1119, %v1115
        %v1692 = vpack.c.b16 %v1120, %v1116
        %v1693 = vpack.c.b16 %v1121, %v1117
        %v1694 = vpack.c.b16 %v1122, %v1118
        %v1695 = vpack.c.b16 %v1127, %v1123
        %v1696 = vpack.c.b16 %v1128, %v1124
        %v1697 = vpack.c.b16 %v1129, %v1125
        %v1698 = vpack.c.b16 %v1130, %v1126
        %v1699 = vpack.c.b16 %v1135, %v1131
        %v1700 = vpack.c.b16 %v1136, %v1132
        %v1701 = vpack.c.b16 %v1137, %v1133
        %v1702 = vpack.c.b16 %v1138, %v1134
        %v1703 = vpack.c.b16 %v1143, %v1139
        %v1704 = vpack.c.b16 %v1144, %v1140
        %v1705 = vpack.c.b16 %v1145, %v1141
        %v1706 = vpack.c.b16 %v1146, %v1142
        %v1707 = vpack.c.b16 %v1151, %v1147
        %v1708 = vpack.c.b16 %v1152, %v1148
        %v1709 = vpack.c.b16 %v1153, %v1149
        %v1710 = vpack.c.b16 %v1154, %v1150
        %v1711 = vpack.c.b16 %v1159, %v1155
        %v1712 = vpack.c.b16 %v1160, %v1156
        %v1713 = vpack.c.b16 %v1161, %v1157
        %v1714 = vpack.c.b16 %v1162, %v1158
        %v1715 = vpack.c.b16 %v1167, %v1163
        %v1716 = vpack.c.b16 %v1168, %v1164
        %v1717 = vpack.c.b16 %v1169, %v1165
        %v1718 = vpack.c.b16 %v1170, %v1166
        %v1719 = vpack.c.b16 %v1175, %v1171
        %v1720 = vpack.c.b16 %v1176, %v1172
        %v1721 = vpack.c.b16 %v1177, %v1173
        %v1722 = vpack.c.b16 %v1178, %v1174
        %v1723 = vpack.c.b16 %v1183, %v1179
        %v1724 = vpack.c.b16 %v1184, %v1180
        %v1725 = vpack.c.b16 %v1185, %v1181
        %v1726 = vpack.c.b16 %v1186, %v1182
        %v1727 = vpack.c.b16 %v1191, %v1187
        %v1728 = vpack.c.b16 %v1192, %v1188
        %v1729 = vpack.c.b16 %v1193, %v1189
        %v1730 = vpack.c.b16 %v1194, %v1190
        %v1731 = vpack.c.b16 %v1199, %v1195
        %v1732 = vpack.c.b16 %v1200, %v1196
        %v1733 = vpack.c.b16 %v1201, %v1197
        %v1734 = vpack.c.b16 %v1202, %v1198
        %v1735 = vpack.c.b16 %v1207, %v1203
        %v1736 = vpack.c.b16 %v1208, %v1204
        %v1737 = vpack.c.b16 %v1209, %v1205
        %v1738 = vpack.c.b16 %v1210, %v1206
        %v1739 = vpack.c.b16 %v1215, %v1211
        %v1740 = vpack.c.b16 %v1216, %v1212
        %v1741 = vpack.c.b16 %v1217, %v1213
        %v1742 = vpack.c.b16 %v1218, %v1214
        %v1743 = vpack.c.b16 %v1223, %v1219
        %v1744 = vpack.c.b16 %v1224, %v1220
        %v1745 = vpack.c.b16 %v1225, %v1221
        %v1746 = vpack.c.b16 %v1226, %v1222
        %v1747 = vpack.c.b16 %v1231, %v1227
        %v1748 = vpack.c.b16 %v1232, %v1228
        %v1749 = vpack.c.b16 %v1233, %v1229
        %v1750 = vpack.c.b16 %v1234, %v1230
        %v1751 = vpack.c.b16 %v1239, %v1235
        %v1752 = vpack.c.b16 %v1240, %v1236
        %v1753 = vpack.c.b16 %v1241, %v1237
        %v1754 = vpack.c.b16 %v1242, %v1238
        %v1755 = vpack.c.b16 %v1247, %v1243
        %v1756 = vpack.c.b16 %v1248, %v1244
        %v1757 = vpack.c.b16 %v1249, %v1245
        %v1758 = vpack.c.b16 %v1250, %v1246
        %v1759 = vpack.c.b16 %v1255, %v1251
        %v1760 = vpack.c.b16 %v1256, %v1252
        %v1761 = vpack.c.b16 %v1257, %v1253
        %v1762 = vpack.c.b16 %v1258, %v1254
        %v1763 = vpack.c.b16 %v1263, %v1259
        %v1764 = vpack.c.b16 %v1264, %v1260
        %v1765 = vpack.c.b16 %v1265, %v1261
        %v1766 = vpack.c.b16 %v1266, %v1262
        %v1767 = vpack.c.b16 %v1271, %v1267
        %v1768 = vpack.c.b16 %v1272, %v1268
        %v1769 = vpack.c.b16 %v1273, %v1269
        %v1770 = vpack.c.b16 %v1274, %v1270
        %v1771 = vpack.c.b16 %v1279, %v1275
        %v1772 = vpack.c.b16 %v1280, %v1276
        %v1773 = vpack.c.b16 %v1281, %v1277
        %v1774 = vpack.c.b16 %v1282, %v1278
        %v1775 = vpack.c.b16 %v1287, %v1283
        %v1776 = vpack.c.b16 %v1288, %v1284
        %v1777 = vpack.c.b16 %v1289, %v1285
        %v1778 = vpack.c.b16 %v1290, %v1286
        %v1779 = vpack.c.b16 %v1295, %v1291
        %v1780 = vpack.c.b16 %v1296, %v1292
        %v1781 = vpack.c.b16 %v1297, %v1293
        %v1782 = vpack.c.b16 %v1298, %v1294
        %v1783 = vpack.c.b16 %v1303, %v1299
        %v1784 = vpack.c.b16 %v1304, %v1300
        %v1785 = vpack.c.b16 %v1305, %v1301
        %v1786 = vpack.c.b16 %v1306, %v1302
        %v1787 = vpack.c.b16 %v1311, %v1307
        %v1788 = vpack.c.b16 %v1312, %v1308
        %v1789 = vpack.c.b16 %v1313, %v1309
        %v1790 = vpack.c.b16 %v1314, %v1310
        %v1791 = vpack.c.b16 %v1319, %v1315
        %v1792 = vpack.c.b16 %v1320, %v1316
        %v1793 = vpack.c.b16 %v1321, %v1317
        %v1794 = vpack.c.b16 %v1322, %v1318
        %v1795 = vpack.c.b16 %v1327, %v1323
        %v1796 = vpack.c.b16 %v1328, %v1324
        %v1797 = vpack.c.b16 %v1329, %v1325
        %v1798 = vpack.c.b16 %v1330, %v1326
        %v1799 = vpack.c.b16 %v1335, %v1331
        %v1800 = vpack.c.b16 %v1336, %v1332
        %v1801 = vpack.c.b16 %v1337, %v1333
        %v1802 = vpack.c.b16 %v1338, %v1334
        %v1803 = vpack.c.b16 %v1343, %v1339
        %v1804 = vpack.c.b16 %v1344, %v1340
        %v1805 = vpack.c.b16 %v1345, %v1341
        %v1806 = vpack.c.b16 %v1346, %v1342
        %v1807 = vpack.c.b16 %v1351, %v1347
        %v1808 = vpack.c.b16 %v1352, %v1348
        %v1809 = vpack.c.b16 %v1353, %v1349
        %v1810 = vpack.c.b16 %v1354, %v1350
        %v1811 = vpack.c.b16 %v1359, %v1355
        %v1812 = vpack.c.b16 %v1360, %v1356
        %v1813 = vpack.c.b16 %v1361, %v1357
        %v1814 = vpack.c.b16 %v1362, %v1358
        %v1815 = vpack.c.b16 %v1367, %v1363
        %v1816 = vpack.c.b16 %v1368, %v1364
        %v1817 = vpack.c.b16 %v1369, %v1365
        %v1818 = vpack.c.b16 %v1370, %v1366
        %v1819 = vpack.c.b16 %v1375, %v1371
        %v1820 = vpack.c.b16 %v1376, %v1372
        %v1821 = vpack.c.b16 %v1377, %v1373
        %v1822 = vpack.c.b16 %v1378, %v1374
        %v1823 = vpack.c.b16 %v1383, %v1379
        %v1824 = vpack.c.b16 %v1384, %v1380
        %v1825 = vpack.c.b16 %v1385, %v1381
        %v1826 = vpack.c.b16 %v1386, %v1382
        %v1827 = vpack.c.b16 %v1391, %v1387
        %v1828 = vpack.c.b16 %v1392, %v1388
        %v1829 = vpack.c.b16 %v1393, %v1389
        %v1830 = vpack.c.b16 %v1394, %v1390
        %v1831 = vpack.c.b16 %v1399, %v1395
        %v1832 = vpack.c.b16 %v1400, %v1396
        %v1833 = vpack.c.b16 %v1401, %v1397
        %v1834 = vpack.c.b16 %v1402, %v1398
        %v1835 = vpack.c.b16 %v1407, %v1403
        %v1836 = vpack.c.b16 %v1408, %v1404
        %v1837 = vpack.c.b16 %v1409, %v1405
        %v1838 = vpack.c.b16 %v1410, %v1406
        %v1839 = vpack.c.b16 %v1415, %v1411
        %v1840 = vpack.c.b16 %v1416, %v1412
        %v1841 = vpack.c.b16 %v1417, %v1413
        %v1842 = vpack.c.b16 %v1418, %v1414
        %v1843 = vpack.c.b16 %v1423, %v1419
        %v1844 = vpack.c.b16 %v1424, %v1420
        %v1845 = vpack.c.b16 %v1425, %v1421
        %v1846 = vpack.c.b16 %v1426, %v1422
        %v1847 = vpack.c.b16 %v1431, %v1427
        %v1848 = vpack.c.b16 %v1432, %v1428
        %v1849 = vpack.c.b16 %v1433, %v1429
        %v1850 = vpack.c.b16 %v1434, %v1430
        %v1851 = vpack.c.b16 %v1439, %v1435
        %v1852 = vpack.c.b16 %v1440, %v1436
        %v1853 = vpack.c.b16 %v1441, %v1437
        %v1854 = vpack.c.b16 %v1442, %v1438
        %v1855 = vpack.c.b16 %v1447, %v1443
        %v1856 = vpack.c.b16 %v1448, %v1444
        %v1857 = vpack.c.b16 %v1449, %v1445
        %v1858 = vpack.c.b16 %v1450, %v1446
        %v1859 = vpack.c.b16 %v1455, %v1451
        %v1860 = vpack.c.b16 %v1456, %v1452
        %v1861 = vpack.c.b16 %v1457, %v1453
        %v1862 = vpack.c.b16 %v1458, %v1454
        %v1863 = vpack.c.b16 %v1463, %v1459
        %v1864 = vpack.c.b16 %v1464, %v1460
        %v1865 = vpack.c.b16 %v1465, %v1461
        %v1866 = vpack.c.b16 %v1466, %v1462
        %v1867 = vpack.c.b16 %v1471, %v1467
        %v1868 = vpack.c.b16 %v1472, %v1468
        %v1869 = vpack.c.b16 %v1473, %v1469
        %v1870 = vpack.c.b16 %v1474, %v1470
        %v1871 = vpack.c.b16 %v1479, %v1475
        %v1872 = vpack.c.b16 %v1480, %v1476
        %v1873 = vpack.c.b16 %v1481, %v1477
        %v1874 = vpack.c.b16 %v1482, %v1478
        %v1875 = vpack.c.b16 %v1487, %v1483
        %v1876 = vpack.c.b16 %v1488, %v1484
        %v1877 = vpack.c.b16 %v1489, %v1485
        %v1878 = vpack.c.b16 %v1490, %v1486
        %v1879 = vpack.c.b16 %v1495, %v1491
        %v1880 = vpack.c.b16 %v1496, %v1492
        %v1881 = vpack.c.b16 %v1497, %v1493
        %v1882 = vpack.c.b16 %v1498, %v1494
        %v1883 = vpack.c.b16 %v1503, %v1499
        %v1884 = vpack.c.b16 %v1504, %v1500
        %v1885 = vpack.c.b16 %v1505, %v1501
        %v1886 = vpack.c.b16 %v1506, %v1502
        %v1887 = vpack.c.b16 %v1511, %v1507
        %v1888 = vpack.c.b16 %v1512, %v1508
        %v1889 = vpack.c.b16 %v1513, %v1509
        %v1890 = vpack.c.b16 %v1514, %v1510
        %v1891 = vpack.c.b16 %v1519, %v1515
        %v1892 = vpack.c.b16 %v1520, %v1516
        %v1893 = vpack.c.b16 %v1521, %v1517
        %v1894 = vpack.c.b16 %v1522, %v1518
        %v1895 = vpack.c.b16 %v1527, %v1523
        %v1896 = vpack.c.b16 %v1528, %v1524
        %v1897 = vpack.c.b16 %v1529, %v1525
        %v1898 = vpack.c.b16 %v1530, %v1526
        %v1899 = vpack.c.b16 %v1535, %v1531
        %v1900 = vpack.c.b16 %v1536, %v1532
        %v1901 = vpack.c.b16 %v1537, %v1533
        %v1902 = vpack.c.b16 %v1538, %v1534
        %v1903 = vpack.c.b16 %v1543, %v1539
        %v1904 = vpack.c.b16 %v1544, %v1540
        %v1905 = vpack.c.b16 %v1545, %v1541
        %v1906 = vpack.c.b16 %v1546, %v1542
        %v1907 = vpack.c.b16 %v1551, %v1547
        %v1908 = vpack.c.b16 %v1552, %v1548
        %v1909 = vpack.c.b16 %v1553, %v1549
        %v1910 = vpack.c.b16 %v1554, %v1550
        %v1911 = vpack.c.b16 %v1559, %v1555
        %v1912 = vpack.c.b16 %v1560, %v1556
        %v1913 = vpack.c.b16 %v1561, %v1557
        %v1914 = vpack.c.b16 %v1562, %v1558
        %v1915 = vpack.c.b16 %v1567, %v1563
        %v1916 = vpack.c.b16 %v1568, %v1564
        %v1917 = vpack.c.b16 %v1569, %v1565
        %v1918 = vpack.c.b16 %v1570, %v1566
        %v1919 = vpack.c.b16 %v1575, %v1571
        %v1920 = vpack.c.b16 %v1576, %v1572
        %v1921 = vpack.c.b16 %v1577, %v1573
        %v1922 = vpack.c.b16 %v1578, %v1574
        %v1923 = vpack.c.b16 %v1583, %v1579
        %v1924 = vpack.c.b16 %v1584, %v1580
        %v1925 = vpack.c.b16 %v1585, %v1581
        %v1926 = vpack.c.b16 %v1586, %v1582
        %v1927 = vpack.c.b16 %v1591, %v1587
        %v1928 = vpack.c.b16 %v1592, %v1588
        %v1929 = vpack.c.b16 %v1593, %v1589
        %v1930 = vpack.c.b16 %v1594, %v1590
        %v1931 = vpack.c.b16 %v1599, %v1595
        %v1932 = vpack.c.b16 %v1600, %v1596
        %v1933 = vpack.c.b16 %v1601, %v1597
        %v1934 = vpack.c.b16 %v1602, %v1598
        %v1935 = vpack.c.b16 %v1607, %v1603
        %v1936 = vpack.c.b16 %v1608, %v1604
        %v1937 = vpack.c.b16 %v1609, %v1605
        %v1938 = vpack.c.b16 %v1610, %v1606
        %v1939 = vpack.c.b16 %v1615, %v1611
        %v1940 = vpack.c.b16 %v1616, %v1612
        %v1941 = vpack.c.b16 %v1617, %v1613
        %v1942 = vpack.c.b16 %v1618, %v1614
        %v1943 = vpack.c.b16 %v1623, %v1619
        %v1944 = vpack.c.b16 %v1624, %v1620
        %v1945 = vpack.c.b16 %v1625, %v1621
        %v1946 = vpack.c.b16 %v1626, %v1622
        %2267 = vmatprep.subr.bf16.mxu0 %v1628
        %2268 = vmatpush1.bf16.msra.mxu0 %v1627
        %2269 = vmatprep.subr.bf16.mxu0 %v1632
        %2270 = vmatpush1.bf16.msra.mxu0 %v1631
        %2271 = vmatprep.subr.bf16.mxu0 %v1636
        %2272 = vmatpush1.bf16.msra.mxu0 %v1635
        %2273 = vmatprep.subr.bf16.mxu0 %v1640
        %2274 = vmatpush1.bf16.msra.mxu0 %v1639
        %2275 = vmatprep.subr.bf16.mxu0 %v1644
        %2276 = vmatpush1.bf16.msra.mxu0 %v1643
        %2277 = vmatprep.subr.bf16.mxu0 %v1648
        %2278 = vmatpush1.bf16.msra.mxu0 %v1647
        %2279 = vmatprep.subr.bf16.mxu0 %v1652
        %2280 = vmatpush1.bf16.msra.mxu0 %v1651
        %2281 = vmatprep.subr.bf16.mxu0 %v1656
        %2282 = vmatpush1.bf16.msra.mxu0 %v1655
        %2283 = vmatprep.subr.bf16.mxu0 %v1660
        %2284 = vmatpush1.bf16.msra.mxu0 %v1659
        %2285 = vmatprep.subr.bf16.mxu0 %v1664
        %2286 = vmatpush1.bf16.msra.mxu0 %v1663
        %2287 = vmatprep.subr.bf16.mxu0 %v1668
        %2288 = vmatpush1.bf16.msra.mxu0 %v1667
        %2289 = vmatprep.subr.bf16.mxu0 %v1672
        %2290 = vmatpush1.bf16.msra.mxu0 %v1671
        %2291 = vmatprep.subr.bf16.mxu0 %v1676
        %2292 = vmatpush1.bf16.msra.mxu0 %v1675
        %2293 = vmatprep.subr.bf16.mxu0 %v1680
        %2294 = vmatpush1.bf16.msra.mxu0 %v1679
        %2295 = vmatprep.subr.bf16.mxu0 %v1684
        %2296 = vmatpush1.bf16.msra.mxu0 %v1683
        %2297 = vmatprep.subr.bf16.mxu0 %v1688
        %2298 = vmatpush1.bf16.msra.mxu0 %v1687
        %2299 = vmatprep.mubr.bf16.mxu0 %v648
        %2300 = vmatmul.mubr.bf16.gmra.mrb[0].mxu0 %v647
        %v2301 = vpop.f32.mrb[0].mxu0
        %v2302 = vadd.f32 0.0, %v2301
        %v2303 = vpop.f32.mrb[0].mxu0
        %v2304 = vadd.f32 0.0, %v2303
        %v2305 = vpop.f32.mrb[0].mxu0
        %v2306 = vpop.f32.mrb[0].mxu0
        %2307 = vdwg.mxu0
        %2308 = vmatprep.subr.bf16.mxu0 %v1692
        %2309 = vmatpush1.bf16.msra.mxu0 %v1691
        %2310 = vmatprep.subr.bf16.mxu0 %v1696
        %2311 = vmatpush1.bf16.msra.mxu0 %v1695
        %2312 = vmatprep.subr.bf16.mxu0 %v1700
        %2313 = vmatpush1.bf16.msra.mxu0 %v1699
        %2314 = vmatprep.subr.bf16.mxu0 %v1704
        %2315 = vmatpush1.bf16.msra.mxu0 %v1703
        %2316 = vmatprep.subr.bf16.mxu0 %v1708
        %2317 = vmatpush1.bf16.msra.mxu0 %v1707
        %2318 = vmatprep.subr.bf16.mxu0 %v1712
        %2319 = vmatpush1.bf16.msra.mxu0 %v1711
        %2320 = vmatprep.subr.bf16.mxu0 %v1716
        %2321 = vmatpush1.bf16.msra.mxu0 %v1715
        %2322 = vmatprep.subr.bf16.mxu0 %v1720
        %2323 = vmatpush1.bf16.msra.mxu0 %v1719
        %2324 = vmatprep.subr.bf16.mxu0 %v1724
        %2325 = vmatpush1.bf16.msra.mxu0 %v1723
        %2326 = vmatprep.subr.bf16.mxu0 %v1728
        %2327 = vmatpush1.bf16.msra.mxu0 %v1727
        %2328 = vmatprep.subr.bf16.mxu0 %v1732
        %2329 = vmatpush1.bf16.msra.mxu0 %v1731
        %2330 = vmatprep.subr.bf16.mxu0 %v1736
        %2331 = vmatpush1.bf16.msra.mxu0 %v1735
        %2332 = vmatprep.subr.bf16.mxu0 %v1740
        %2333 = vmatpush1.bf16.msra.mxu0 %v1739
        %2334 = vmatprep.subr.bf16.mxu0 %v1744
        %2335 = vmatpush1.bf16.msra.mxu0 %v1743
        %2336 = vmatprep.subr.bf16.mxu0 %v1748
        %2337 = vmatpush1.bf16.msra.mxu0 %v1747
        %2338 = vmatprep.subr.bf16.mxu0 %v1752
        %2339 = vmatpush1.bf16.msra.mxu0 %v1751
        %2340 = vmatprep.mubr.bf16.mxu0 %v650
        %2341 = vmatmul.mubr.bf16.gmra.mrb[0].mxu0 %v649
        %v2342 = vpop.f32.mrb[0].mxu0
        %v2343 = vadd.f32 %v2302, %v2342
        %v2344 = vpop.f32.mrb[0].mxu0
        %v2345 = vadd.f32 %v2304, %v2344
        %v2346 = vpop.f32.mrb[0].mxu0
        %v2347 = vpop.f32.mrb[0].mxu0
        %2348 = vdwg.mxu0
        %2349 = vmatprep.subr.bf16.mxu0 %v1756
        %2350 = vmatpush1.bf16.msra.mxu0 %v1755
        %2351 = vmatprep.subr.bf16.mxu0 %v1760
        %2352 = vmatpush1.bf16.msra.mxu0 %v1759
        %2353 = vmatprep.subr.bf16.mxu0 %v1764
        %2354 = vmatpush1.bf16.msra.mxu0 %v1763
        %2355 = vmatprep.subr.bf16.mxu0 %v1768
        %2356 = vmatpush1.bf16.msra.mxu0 %v1767
        %2357 = vmatprep.subr.bf16.mxu0 %v1772
        %2358 = vmatpush1.bf16.msra.mxu0 %v1771
        %2359 = vmatprep.subr.bf16.mxu0 %v1776
        %2360 = vmatpush1.bf16.msra.mxu0 %v1775
        %2361 = vmatprep.subr.bf16.mxu0 %v1780
        %2362 = vmatpush1.bf16.msra.mxu0 %v1779
        %2363 = vmatprep.subr.bf16.mxu0 %v1784
        %2364 = vmatpush1.bf16.msra.mxu0 %v1783
        %2365 = vmatprep.subr.bf16.mxu0 %v1788
        %2366 = vmatpush1.bf16.msra.mxu0 %v1787
        %2367 = vmatprep.subr.bf16.mxu0 %v1792
        %2368 = vmatpush1.bf16.msra.mxu0 %v1791
        %2369 = vmatprep.subr.bf16.mxu0 %v1796
        %2370 = vmatpush1.bf16.msra.mxu0 %v1795
        %2371 = vmatprep.subr.bf16.mxu0 %v1800
        %2372 = vmatpush1.bf16.msra.mxu0 %v1799
        %2373 = vmatprep.subr.bf16.mxu0 %v1804
        %2374 = vmatpush1.bf16.msra.mxu0 %v1803
        %2375 = vmatprep.subr.bf16.mxu0 %v1808
        %2376 = vmatpush1.bf16.msra.mxu0 %v1807
        %2377 = vmatprep.subr.bf16.mxu0 %v1812
        %2378 = vmatpush1.bf16.msra.mxu0 %v1811
        %2379 = vmatprep.subr.bf16.mxu0 %v1816
        %2380 = vmatpush1.bf16.msra.mxu0 %v1815
        %2381 = vmatprep.mubr.bf16.mxu0 %v652
        %2382 = vmatmul.mubr.bf16.gmra.mrb[0].mxu0 %v651
        %v2383 = vpop.f32.mrb[0].mxu0
        %v2384 = vadd.f32 %v2343, %v2383
        %v2385 = vpop.f32.mrb[0].mxu0
        %v2386 = vadd.f32 %v2345, %v2385
        %v2387 = vpop.f32.mrb[0].mxu0
        %v2388 = vpop.f32.mrb[0].mxu0
        %2389 = vdwg.mxu0
        %2390 = vmatprep.subr.bf16.mxu0 %v1820
        %2391 = vmatpush1.bf16.msra.mxu0 %v1819
        %2392 = vmatprep.subr.bf16.mxu0 %v1824
        %2393 = vmatpush1.bf16.msra.mxu0 %v1823
        %2394 = vmatprep.subr.bf16.mxu0 %v1828
        %2395 = vmatpush1.bf16.msra.mxu0 %v1827
        %2396 = vmatprep.subr.bf16.mxu0 %v1832
        %2397 = vmatpush1.bf16.msra.mxu0 %v1831
        %2398 = vmatprep.subr.bf16.mxu0 %v1836
        %2399 = vmatpush1.bf16.msra.mxu0 %v1835
        %2400 = vmatprep.subr.bf16.mxu0 %v1840
        %2401 = vmatpush1.bf16.msra.mxu0 %v1839
        %2402 = vmatprep.subr.bf16.mxu0 %v1844
        %2403 = vmatpush1.bf16.msra.mxu0 %v1843
        %2404 = vmatprep.subr.bf16.mxu0 %v1848
        %2405 = vmatpush1.bf16.msra.mxu0 %v1847
        %2406 = vmatprep.subr.bf16.mxu0 %v1852
        %2407 = vmatpush1.bf16.msra.mxu0 %v1851
        %2408 = vmatprep.subr.bf16.mxu0 %v1856
        %2409 = vmatpush1.bf16.msra.mxu0 %v1855
        %2410 = vmatprep.subr.bf16.mxu0 %v1860
        %2411 = vmatpush1.bf16.msra.mxu0 %v1859
        %2412 = vmatprep.subr.bf16.mxu0 %v1864
        %2413 = vmatpush1.bf16.msra.mxu0 %v1863
        %2414 = vmatprep.subr.bf16.mxu0 %v1868
        %2415 = vmatpush1.bf16.msra.mxu0 %v1867
        %2416 = vmatprep.subr.bf16.mxu0 %v1872
        %2417 = vmatpush1.bf16.msra.mxu0 %v1871
        %2418 = vmatprep.subr.bf16.mxu0 %v1876
        %2419 = vmatpush1.bf16.msra.mxu0 %v1875
        %2420 = vmatprep.subr.bf16.mxu0 %v1880
        %2421 = vmatpush1.bf16.msra.mxu0 %v1879
        %2422 = vmatprep.mubr.bf16.mxu0 %v654
        %2423 = vmatmul.mubr.bf16.gmra.mrb[0].mxu0 %v653
        %v2424 = vpop.f32.mrb[0].mxu0
        %v2425 = vadd.f32 %v2384, %v2424
        %v2426 = vpop.f32.mrb[0].mxu0
        %v2427 = vadd.f32 %v2386, %v2426
        %v2428 = vpop.f32.mrb[0].mxu0
        %v2429 = vpop.f32.mrb[0].mxu0
        %2430 = vdwg.mxu0
        %2431 = vmatprep.subr.bf16.mxu0 %v1884
        %2432 = vmatpush1.bf16.msra.mxu0 %v1883
        %2433 = vmatprep.subr.bf16.mxu0 %v1888
        %2434 = vmatpush1.bf16.msra.mxu0 %v1887
        %2435 = vmatprep.subr.bf16.mxu0 %v1892
        %2436 = vmatpush1.bf16.msra.mxu0 %v1891
        %2437 = vmatprep.subr.bf16.mxu0 %v1896
        %2438 = vmatpush1.bf16.msra.mxu0 %v1895
        %2439 = vmatprep.subr.bf16.mxu0 %v1900
        %2440 = vmatpush1.bf16.msra.mxu0 %v1899
        %2441 = vmatprep.subr.bf16.mxu0 %v1904
        %2442 = vmatpush1.bf16.msra.mxu0 %v1903
        %2443 = vmatprep.subr.bf16.mxu0 %v1908
        %2444 = vmatpush1.bf16.msra.mxu0 %v1907
        %2445 = vmatprep.subr.bf16.mxu0 %v1912
        %2446 = vmatpush1.bf16.msra.mxu0 %v1911
        %2447 = vmatprep.subr.bf16.mxu0 %v1916
        %2448 = vmatpush1.bf16.msra.mxu0 %v1915
        %2449 = vmatprep.subr.bf16.mxu0 %v1920
        %2450 = vmatpush1.bf16.msra.mxu0 %v1919
        %2451 = vmatprep.subr.bf16.mxu0 %v1924
        %2452 = vmatpush1.bf16.msra.mxu0 %v1923
        %2453 = vmatprep.subr.bf16.mxu0 %v1928
        %2454 = vmatpush1.bf16.msra.mxu0 %v1927
        %2455 = vmatprep.subr.bf16.mxu0 %v1932
        %2456 = vmatpush1.bf16.msra.mxu0 %v1931
        %2457 = vmatprep.subr.bf16.mxu0 %v1936
        %2458 = vmatpush1.bf16.msra.mxu0 %v1935
        %2459 = vmatprep.subr.bf16.mxu0 %v1940
        %2460 = vmatpush1.bf16.msra.mxu0 %v1939
        %2461 = vmatprep.subr.bf16.mxu0 %v1944
        %2462 = vmatpush1.bf16.msra.mxu0 %v1943
        %2463 = vmatprep.mubr.bf16.mxu0 %v656
        %2464 = vmatmul.mubr.bf16.gmra.mrb[0].mxu0 %v655
        %v2465 = vpop.f32.mrb[0].mxu0
        %v2466 = vadd.f32 %v2425, %v2465
        %v2467 = vpop.f32.mrb[0].mxu0
        %v2468 = vadd.f32 %v2427, %v2467
        %v2469 = vpop.f32.mrb[0].mxu0
        %v2470 = vpop.f32.mrb[0].mxu0
        %2471 = vdwg.mxu0
        %2472 = vmatprep.subr.bf16.mxu0 %v1630
        %2473 = vmatpush1.bf16.msra.mxu0 %v1629
        %2474 = vmatprep.subr.bf16.mxu0 %v1634
        %2475 = vmatpush1.bf16.msra.mxu0 %v1633
        %2476 = vmatprep.subr.bf16.mxu0 %v1638
        %2477 = vmatpush1.bf16.msra.mxu0 %v1637
        %2478 = vmatprep.subr.bf16.mxu0 %v1642
        %2479 = vmatpush1.bf16.msra.mxu0 %v1641
        %2480 = vmatprep.subr.bf16.mxu0 %v1646
        %2481 = vmatpush1.bf16.msra.mxu0 %v1645
        %2482 = vmatprep.subr.bf16.mxu0 %v1650
        %2483 = vmatpush1.bf16.msra.mxu0 %v1649
        %2484 = vmatprep.subr.bf16.mxu0 %v1654
        %2485 = vmatpush1.bf16.msra.mxu0 %v1653
        %2486 = vmatprep.subr.bf16.mxu0 %v1658
        %2487 = vmatpush1.bf16.msra.mxu0 %v1657
        %2488 = vmatprep.subr.bf16.mxu0 %v1662
        %2489 = vmatpush1.bf16.msra.mxu0 %v1661
        %2490 = vmatprep.subr.bf16.mxu0 %v1666
        %2491 = vmatpush1.bf16.msra.mxu0 %v1665
        %2492 = vmatprep.subr.bf16.mxu0 %v1670
        %2493 = vmatpush1.bf16.msra.mxu0 %v1669
        %2494 = vmatprep.subr.bf16.mxu0 %v1674
        %2495 = vmatpush1.bf16.msra.mxu0 %v1673
        %2496 = vmatprep.subr.bf16.mxu0 %v1678
        %2497 = vmatpush1.bf16.msra.mxu0 %v1677
        %2498 = vmatprep.subr.bf16.mxu0 %v1682
        %2499 = vmatpush1.bf16.msra.mxu0 %v1681
        %2500 = vmatprep.subr.bf16.mxu0 %v1686
        %2501 = vmatpush1.bf16.msra.mxu0 %v1685
        %2502 = vmatprep.subr.bf16.mxu0 %v1690
        %2503 = vmatpush1.bf16.msra.mxu0 %v1689
        %2504 = vmatprep.mubr.bf16.mxu0 %v648
        %2505 = vmatmul.mubr.bf16.gmra.mrb[0].mxu0 %v647
        %v2506 = vpop.f32.mrb[0].mxu0
        %v2507 = vadd.f32 0.0, %v2506
        %v2508 = vpop.f32.mrb[0].mxu0
        %v2509 = vadd.f32 0.0, %v2508
        %v2510 = vpop.f32.mrb[0].mxu0
        %v2511 = vpop.f32.mrb[0].mxu0
        %2512 = vdwg.mxu0
        %2513 = vmatprep.subr.bf16.mxu0 %v1694
        %2514 = vmatpush1.bf16.msra.mxu0 %v1693
        %2515 = vmatprep.subr.bf16.mxu0 %v1698
        %2516 = vmatpush1.bf16.msra.mxu0 %v1697
        %2517 = vmatprep.subr.bf16.mxu0 %v1702
        %2518 = vmatpush1.bf16.msra.mxu0 %v1701
        %2519 = vmatprep.subr.bf16.mxu0 %v1706
        %2520 = vmatpush1.bf16.msra.mxu0 %v1705
        %2521 = vmatprep.subr.bf16.mxu0 %v1710
        %2522 = vmatpush1.bf16.msra.mxu0 %v1709
        %2523 = vmatprep.subr.bf16.mxu0 %v1714
        %2524 = vmatpush1.bf16.msra.mxu0 %v1713
        %2525 = vmatprep.subr.bf16.mxu0 %v1718
        %2526 = vmatpush1.bf16.msra.mxu0 %v1717
        %2527 = vmatprep.subr.bf16.mxu0 %v1722
        %2528 = vmatpush1.bf16.msra.mxu0 %v1721
        %2529 = vmatprep.subr.bf16.mxu0 %v1726
        %2530 = vmatpush1.bf16.msra.mxu0 %v1725
        %2531 = vmatprep.subr.bf16.mxu0 %v1730
        %2532 = vmatpush1.bf16.msra.mxu0 %v1729
        %2533 = vmatprep.subr.bf16.mxu0 %v1734
        %2534 = vmatpush1.bf16.msra.mxu0 %v1733
        %2535 = vmatprep.subr.bf16.mxu0 %v1738
        %2536 = vmatpush1.bf16.msra.mxu0 %v1737
        %2537 = vmatprep.subr.bf16.mxu0 %v1742
        %2538 = vmatpush1.bf16.msra.mxu0 %v1741
        %2539 = vmatprep.subr.bf16.mxu0 %v1746
        %2540 = vmatpush1.bf16.msra.mxu0 %v1745
        %2541 = vmatprep.subr.bf16.mxu0 %v1750
        %2542 = vmatpush1.bf16.msra.mxu0 %v1749
        %2543 = vmatprep.subr.bf16.mxu0 %v1754
        %2544 = vmatpush1.bf16.msra.mxu0 %v1753
        %2545 = vmatprep.mubr.bf16.mxu0 %v650
        %2546 = vmatmul.mubr.bf16.gmra.mrb[0].mxu0 %v649
        %v2547 = vpop.f32.mrb[0].mxu0
        %v2548 = vadd.f32 %v2507, %v2547
        %v2549 = vpop.f32.mrb[0].mxu0
        %v2550 = vadd.f32 %v2509, %v2549
        %v2551 = vpop.f32.mrb[0].mxu0
        %v2552 = vpop.f32.mrb[0].mxu0
        %2553 = vdwg.mxu0
        %2554 = vmatprep.subr.bf16.mxu0 %v1758
        %2555 = vmatpush1.bf16.msra.mxu0 %v1757
        %2556 = vmatprep.subr.bf16.mxu0 %v1762
        %2557 = vmatpush1.bf16.msra.mxu0 %v1761
        %2558 = vmatprep.subr.bf16.mxu0 %v1766
        %2559 = vmatpush1.bf16.msra.mxu0 %v1765
        %2560 = vmatprep.subr.bf16.mxu0 %v1770
        %2561 = vmatpush1.bf16.msra.mxu0 %v1769
        %2562 = vmatprep.subr.bf16.mxu0 %v1774
        %2563 = vmatpush1.bf16.msra.mxu0 %v1773
        %2564 = vmatprep.subr.bf16.mxu0 %v1778
        %2565 = vmatpush1.bf16.msra.mxu0 %v1777
        %2566 = vmatprep.subr.bf16.mxu0 %v1782
        %2567 = vmatpush1.bf16.msra.mxu0 %v1781
        %2568 = vmatprep.subr.bf16.mxu0 %v1786
        %2569 = vmatpush1.bf16.msra.mxu0 %v1785
        %2570 = vmatprep.subr.bf16.mxu0 %v1790
        %2571 = vmatpush1.bf16.msra.mxu0 %v1789
        %2572 = vmatprep.subr.bf16.mxu0 %v1794
        %2573 = vmatpush1.bf16.msra.mxu0 %v1793
        %2574 = vmatprep.subr.bf16.mxu0 %v1798
        %2575 = vmatpush1.bf16.msra.mxu0 %v1797
        %2576 = vmatprep.subr.bf16.mxu0 %v1802
        %2577 = vmatpush1.bf16.msra.mxu0 %v1801
        %2578 = vmatprep.subr.bf16.mxu0 %v1806
        %2579 = vmatpush1.bf16.msra.mxu0 %v1805
        %2580 = vmatprep.subr.bf16.mxu0 %v1810
        %2581 = vmatpush1.bf16.msra.mxu0 %v1809
        %2582 = vmatprep.subr.bf16.mxu0 %v1814
        %2583 = vmatpush1.bf16.msra.mxu0 %v1813
        %2584 = vmatprep.subr.bf16.mxu0 %v1818
        %2585 = vmatpush1.bf16.msra.mxu0 %v1817
        %2586 = vmatprep.mubr.bf16.mxu0 %v652
        %2587 = vmatmul.mubr.bf16.gmra.mrb[0].mxu0 %v651
        %v2588 = vpop.f32.mrb[0].mxu0
        %v2589 = vadd.f32 %v2548, %v2588
        %v2590 = vpop.f32.mrb[0].mxu0
        %v2591 = vadd.f32 %v2550, %v2590
        %v2592 = vpop.f32.mrb[0].mxu0
        %v2593 = vpop.f32.mrb[0].mxu0
        %2594 = vdwg.mxu0
        %2595 = vmatprep.subr.bf16.mxu0 %v1822
        %2596 = vmatpush1.bf16.msra.mxu0 %v1821
        %2597 = vmatprep.subr.bf16.mxu0 %v1826
        %2598 = vmatpush1.bf16.msra.mxu0 %v1825
        %2599 = vmatprep.subr.bf16.mxu0 %v1830
        %2600 = vmatpush1.bf16.msra.mxu0 %v1829
        %2601 = vmatprep.subr.bf16.mxu0 %v1834
        %2602 = vmatpush1.bf16.msra.mxu0 %v1833
        %2603 = vmatprep.subr.bf16.mxu0 %v1838
        %2604 = vmatpush1.bf16.msra.mxu0 %v1837
        %2605 = vmatprep.subr.bf16.mxu0 %v1842
        %2606 = vmatpush1.bf16.msra.mxu0 %v1841
        %2607 = vmatprep.subr.bf16.mxu0 %v1846
        %2608 = vmatpush1.bf16.msra.mxu0 %v1845
        %2609 = vmatprep.subr.bf16.mxu0 %v1850
        %2610 = vmatpush1.bf16.msra.mxu0 %v1849
        %2611 = vmatprep.subr.bf16.mxu0 %v1854
        %2612 = vmatpush1.bf16.msra.mxu0 %v1853
        %2613 = vmatprep.subr.bf16.mxu0 %v1858
        %2614 = vmatpush1.bf16.msra.mxu0 %v1857
        %2615 = vmatprep.subr.bf16.mxu0 %v1862
        %2616 = vmatpush1.bf16.msra.mxu0 %v1861
        %2617 = vmatprep.subr.bf16.mxu0 %v1866
        %2618 = vmatpush1.bf16.msra.mxu0 %v1865
        %2619 = vmatprep.subr.bf16.mxu0 %v1870
        %2620 = vmatpush1.bf16.msra.mxu0 %v1869
        %2621 = vmatprep.subr.bf16.mxu0 %v1874
        %2622 = vmatpush1.bf16.msra.mxu0 %v1873
        %2623 = vmatprep.subr.bf16.mxu0 %v1878
        %2624 = vmatpush1.bf16.msra.mxu0 %v1877
        %2625 = vmatprep.subr.bf16.mxu0 %v1882
        %2626 = vmatpush1.bf16.msra.mxu0 %v1881
        %2627 = vmatprep.mubr.bf16.mxu0 %v654
        %2628 = vmatmul.mubr.bf16.gmra.mrb[0].mxu0 %v653
        %v2629 = vpop.f32.mrb[0].mxu0
        %v2630 = vadd.f32 %v2589, %v2629
        %v2631 = vpop.f32.mrb[0].mxu0
        %v2632 = vadd.f32 %v2591, %v2631
        %v2633 = vpop.f32.mrb[0].mxu0
        %v2634 = vpop.f32.mrb[0].mxu0
        %2635 = vdwg.mxu0
        %2636 = vmatprep.subr.bf16.mxu0 %v1886
        %2637 = vmatpush1.bf16.msra.mxu0 %v1885
        %2638 = vmatprep.subr.bf16.mxu0 %v1890
        %2639 = vmatpush1.bf16.msra.mxu0 %v1889
        %2640 = vmatprep.subr.bf16.mxu0 %v1894
        %2641 = vmatpush1.bf16.msra.mxu0 %v1893
        %2642 = vmatprep.subr.bf16.mxu0 %v1898
        %2643 = vmatpush1.bf16.msra.mxu0 %v1897
        %2644 = vmatprep.subr.bf16.mxu0 %v1902
        %2645 = vmatpush1.bf16.msra.mxu0 %v1901
        %2646 = vmatprep.subr.bf16.mxu0 %v1906
        %2647 = vmatpush1.bf16.msra.mxu0 %v1905
        %2648 = vmatprep.subr.bf16.mxu0 %v1910
        %2649 = vmatpush1.bf16.msra.mxu0 %v1909
        %2650 = vmatprep.subr.bf16.mxu0 %v1914
        %2651 = vmatpush1.bf16.msra.mxu0 %v1913
        %2652 = vmatprep.subr.bf16.mxu0 %v1918
        %2653 = vmatpush1.bf16.msra.mxu0 %v1917
        %2654 = vmatprep.subr.bf16.mxu0 %v1922
        %2655 = vmatpush1.bf16.msra.mxu0 %v1921
        %2656 = vmatprep.subr.bf16.mxu0 %v1926
        %2657 = vmatpush1.bf16.msra.mxu0 %v1925
        %2658 = vmatprep.subr.bf16.mxu0 %v1930
        %2659 = vmatpush1.bf16.msra.mxu0 %v1929
        %2660 = vmatprep.subr.bf16.mxu0 %v1934
        %2661 = vmatpush1.bf16.msra.mxu0 %v1933
        %2662 = vmatprep.subr.bf16.mxu0 %v1938
        %2663 = vmatpush1.bf16.msra.mxu0 %v1937
        %2664 = vmatprep.subr.bf16.mxu0 %v1942
        %2665 = vmatpush1.bf16.msra.mxu0 %v1941
        %2666 = vmatprep.subr.bf16.mxu0 %v1946
        %2667 = vmatpush1.bf16.msra.mxu0 %v1945
        %2668 = vmatprep.mubr.bf16.mxu0 %v656
        %2669 = vmatmul.mubr.bf16.gmra.mrb[0].mxu0 %v655
        %v2670 = vpop.f32.mrb[0].mxu0
        %v2671 = vadd.f32 %v2630, %v2670
        %v2672 = vpop.f32.mrb[0].mxu0
        %v2673 = vadd.f32 %v2632, %v2672
        %v2674 = vpop.f32.mrb[0].mxu0
        %v2675 = vpop.f32.mrb[0].mxu0
        %2676 = vdwg.mxu0
        %v2677 = vadd.f32 %v303, %v2466
        %v2678 = vadd.f32 %v304, %v2468
        %v2679 = vadd.f32 %v305, %v2671
        %v2680 = vadd.f32 %v306, %v2673
        %2681 = vst [vmem:[#allocation2] sm:$0xff] %v2677
        %2682 = vst [vmem:[#allocation2 + $0x8] sm:$0xff] %v2678
        %2683 = vst [vmem:[#allocation2 + $0x10] sm:$0xff] %v2679
        %2684 = vst [vmem:[#allocation2 + $0x18] sm:$0xff] %v2680
        %p2685 = scmp.eq.s32.totalorder %s22, 4
        // Predicated region
        $region57: #{classifier_forward.1} parent=43 // pred_check
          %p2686 = pneg %p2685
        $region58: #{classifier_forward.1} parent=43 // pred_check_branch
          %2688 = sbr.rel (%p2686) target = $region60
        $region59: #{classifier_forward.1} parent=43 // pred_region
          %v2689 = vld [vmem:[#allocation2] sm:$0xff]
          %v2690 = vld [vmem:[#allocation2 + $0x8] sm:$0xff]
          %v2691 = vld [vmem:[#allocation2 + $0x10] sm:$0xff]
          %v2692 = vld [vmem:[#allocation2 + $0x18] sm:$0xff]
          %v2693 = vld [vmem:[%s2] sm:$0xf]
          %v2695 = vlaneseq
          %v2696 = vshrl.u32 %v2695, 7
          %v2697 = vsub.s32 0, %v2696
          %v2698 = vrot.slane %v2693, %v2697
          %v2699 = vlaneseq
          %v2700 = vshrl.u32 %v2699, 7
          %v2701 = vsub.s32 1, %v2700
          %v2702 = vrot.slane %v2693, %v2701
          %v2703 = vlaneseq
          %v2704 = vshrl.u32 %v2703, 7
          %v2705 = vsub.s32 2, %v2704
          %v2706 = vrot.slane %v2693, %v2705
          %v2707 = vlaneseq
          %v2708 = vshrl.u32 %v2707, 7
          %v2709 = vsub.s32 3, %v2708
          %v2710 = vrot.slane %v2693, %v2709
          %v2715 = vmul.f32 %v2689, %v2698
          %v2716 = vmul.f32 %v2690, %v2702
          %v2717 = vmul.f32 %v2691, %v2706
          %v2718 = vmul.f32 %v2692, %v2710
          %v2719 = vld [vmem:[%s3] sm:$0xf]
          %v2721 = vlaneseq
          %v2722 = vshrl.u32 %v2721, 7
          %v2723 = vsub.s32 0, %v2722
          %v2724 = vrot.slane %v2719, %v2723
          %v2725 = vlaneseq
          %v2726 = vshrl.u32 %v2725, 7
          %v2727 = vsub.s32 1, %v2726
          %v2728 = vrot.slane %v2719, %v2727
          %v2729 = vlaneseq
          %v2730 = vshrl.u32 %v2729, 7
          %v2731 = vsub.s32 2, %v2730
          %v2732 = vrot.slane %v2719, %v2731
          %v2733 = vlaneseq
          %v2734 = vshrl.u32 %v2733, 7
          %v2735 = vsub.s32 3, %v2734
          %v2736 = vrot.slane %v2719, %v2735
          %v2741 = vadd.f32 %v2715, %v2724
          %v2742 = vadd.f32 %v2716, %v2728
          %v2743 = vadd.f32 %v2717, %v2732
          %v2744 = vadd.f32 %v2718, %v2736
          %v2745 = vmax.f32 %v2741, 0.0
          %v2746 = vmax.f32 %v2742, 0.0
          %v2747 = vmax.f32 %v2743, 0.0
          %v2748 = vmax.f32 %v2744, 0.0
          %v2749 = vld [vmem:[%s4] sm:$0xff]
          %v2750 = vld [vmem:[%s4 + $0x8] sm:$0xff]
          %v2751 = vld [vmem:[%s4 + $0x10] sm:$0xff]
          %v2752 = vld [vmem:[%s4 + $0x18] sm:$0xff]
          %v2753 = vld [vmem:[%s4 + $0x20] sm:$0xff]
          %v2754 = vld [vmem:[%s4 + $0x28] sm:$0xff]
          %v2755 = vld [vmem:[%s4 + $0x30] sm:$0xff]
          %v2756 = vld [vmem:[%s4 + $0x38] sm:$0xff]
          %v2757 = vld [vmem:[%s4 + $0x40] sm:$0xff]
          %v2758 = vld [vmem:[%s4 + $0x48] sm:$0xff]
          %v2759 = vld [vmem:[%s4 + $0x50] sm:$0xff]
          %v2760 = vld [vmem:[%s4 + $0x58] sm:$0xff]
          %v2761 = vld [vmem:[%s4 + $0x60] sm:$0xff]
          %v2762 = vld [vmem:[%s4 + $0x68] sm:$0xff]
          %v2763 = vld [vmem:[%s4 + $0x70] sm:$0xff]
          %v2764 = vld [vmem:[%s4 + $0x78] sm:$0xff]
          %v2765 = vld [vmem:[%s4 + $0x80] sm:$0xff]
          %v2766 = vld [vmem:[%s4 + $0x88] sm:$0xff]
          %v2767 = vld [vmem:[%s4 + $0x90] sm:$0xff]
          %v2768 = vld [vmem:[%s4 + $0x98] sm:$0xff]
          %v2769 = vld [vmem:[%s4 + $0xa0] sm:$0xff]
          %v2770 = vld [vmem:[%s4 + $0xa8] sm:$0xff]
          %v2771 = vld [vmem:[%s4 + $0xb0] sm:$0xff]
          %v2772 = vld [vmem:[%s4 + $0xb8] sm:$0xff]
          %v2773 = vld [vmem:[%s4 + $0xc0] sm:$0xff]
          %v2774 = vld [vmem:[%s4 + $0xc8] sm:$0xff]
          %v2775 = vld [vmem:[%s4 + $0xd0] sm:$0xff]
          %v2776 = vld [vmem:[%s4 + $0xd8] sm:$0xff]
          %v2777 = vld [vmem:[%s4 + $0xe0] sm:$0xff]
          %v2778 = vld [vmem:[%s4 + $0xe8] sm:$0xff]
          %v2779 = vld [vmem:[%s4 + $0xf0] sm:$0xff]
          %v2780 = vld [vmem:[%s4 + $0xf8] sm:$0xff]
          %v2781 = vld [vmem:[%s4 + $0x100] sm:$0xff]
          %v2782 = vld [vmem:[%s4 + $0x108] sm:$0xff]
          %v2783 = vld [vmem:[%s4 + $0x110] sm:$0xff]
          %v2784 = vld [vmem:[%s4 + $0x118] sm:$0xff]
          %v2785 = vld [vmem:[%s4 + $0x120] sm:$0xff]
          %v2786 = vld [vmem:[%s4 + $0x128] sm:$0xff]
          %v2787 = vld [vmem:[%s4 + $0x130] sm:$0xff]
          %v2788 = vld [vmem:[%s4 + $0x138] sm:$0xff]
          %v2789 = vld [vmem:[%s4 + $0x140] sm:$0xff]
          %v2790 = vld [vmem:[%s4 + $0x148] sm:$0xff]
          %v2791 = vld [vmem:[%s4 + $0x150] sm:$0xff]
          %v2792 = vld [vmem:[%s4 + $0x158] sm:$0xff]
          %v2793 = vld [vmem:[%s4 + $0x160] sm:$0xff]
          %v2794 = vld [vmem:[%s4 + $0x168] sm:$0xff]
          %v2795 = vld [vmem:[%s4 + $0x170] sm:$0xff]
          %v2796 = vld [vmem:[%s4 + $0x178] sm:$0xff]
          %v2797 = vld [vmem:[%s4 + $0x180] sm:$0xff]
          %v2798 = vld [vmem:[%s4 + $0x188] sm:$0xff]
          %v2799 = vld [vmem:[%s4 + $0x190] sm:$0xff]
          %v2800 = vld [vmem:[%s4 + $0x198] sm:$0xff]
          %v2801 = vld [vmem:[%s4 + $0x1a0] sm:$0xff]
          %v2802 = vld [vmem:[%s4 + $0x1a8] sm:$0xff]
          %v2803 = vld [vmem:[%s4 + $0x1b0] sm:$0xff]
          %v2804 = vld [vmem:[%s4 + $0x1b8] sm:$0xff]
          %v2805 = vld [vmem:[%s4 + $0x1c0] sm:$0xff]
          %v2806 = vld [vmem:[%s4 + $0x1c8] sm:$0xff]
          %v2807 = vld [vmem:[%s4 + $0x1d0] sm:$0xff]
          %v2808 = vld [vmem:[%s4 + $0x1d8] sm:$0xff]
          %v2809 = vld [vmem:[%s4 + $0x1e0] sm:$0xff]
          %v2810 = vld [vmem:[%s4 + $0x1e8] sm:$0xff]
          %v2811 = vld [vmem:[%s4 + $0x1f0] sm:$0xff]
          %v2812 = vld [vmem:[%s4 + $0x1f8] sm:$0xff]
          %v2813 = vld [vmem:[#allocation6] sm:$0x1]
          %v2815 = vlaneseq
          %v2816 = vshrl.u32 %v2815, 7
          %v2817 = vsub.s32 0, %v2816
          %v2818 = vrot.slane %v2813, %v2817
          %2820 = vmatprep.subr.mxu0 0.0
          %2821 = vmatpush1.msra.mxu0 %v2749
          %2822 = vmatprep.subr.mxu0 0.0
          %2823 = vmatpush1.msra.mxu0 %v2750
          %2824 = vmatprep.subr.mxu0 0.0
          %2825 = vmatpush1.msra.mxu0 %v2751
          %2826 = vmatprep.subr.mxu0 0.0
          %2827 = vmatpush1.msra.mxu0 %v2752
          %2828 = vmatprep.subr.mxu0 0.0
          %2829 = vmatpush1.msra.mxu0 %v2753
          %2830 = vmatprep.subr.mxu0 0.0
          %2831 = vmatpush1.msra.mxu0 %v2754
          %2832 = vmatprep.subr.mxu0 0.0
          %2833 = vmatpush1.msra.mxu0 %v2755
          %2834 = vmatprep.subr.mxu0 0.0
          %2835 = vmatpush1.msra.mxu0 %v2756
          %2836 = vmatprep.subr.mxu0 0.0
          %2837 = vmatpush1.msra.mxu0 %v2757
          %2838 = vmatprep.subr.mxu0 0.0
          %2839 = vmatpush1.msra.mxu0 %v2758
          %2840 = vmatprep.subr.mxu0 0.0
          %2841 = vmatpush1.msra.mxu0 %v2759
          %2842 = vmatprep.subr.mxu0 0.0
          %2843 = vmatpush1.msra.mxu0 %v2760
          %2844 = vmatprep.subr.mxu0 0.0
          %2845 = vmatpush1.msra.mxu0 %v2761
          %2846 = vmatprep.subr.mxu0 0.0
          %2847 = vmatpush1.msra.mxu0 %v2762
          %2848 = vmatprep.subr.mxu0 0.0
          %2849 = vmatpush1.msra.mxu0 %v2763
          %2850 = vmatprep.subr.mxu0 0.0
          %2851 = vmatpush1.msra.mxu0 %v2764
          %2852 = vmatprep.subr.mxu0 0.0
          %2853 = vmatpush1.msra.mxu0 %v2765
          %2854 = vmatprep.subr.mxu0 0.0
          %2855 = vmatpush1.msra.mxu0 %v2766
          %2856 = vmatprep.subr.mxu0 0.0
          %2857 = vmatpush1.msra.mxu0 %v2767
          %2858 = vmatprep.subr.mxu0 0.0
          %2859 = vmatpush1.msra.mxu0 %v2768
          %2860 = vmatprep.subr.mxu0 0.0
          %2861 = vmatpush1.msra.mxu0 %v2769
          %2862 = vmatprep.subr.mxu0 0.0
          %2863 = vmatpush1.msra.mxu0 %v2770
          %2864 = vmatprep.subr.mxu0 0.0
          %2865 = vmatpush1.msra.mxu0 %v2771
          %2866 = vmatprep.subr.mxu0 0.0
          %2867 = vmatpush1.msra.mxu0 %v2772
          %2868 = vmatprep.subr.mxu0 0.0
          %2869 = vmatpush1.msra.mxu0 %v2773
          %2870 = vmatprep.subr.mxu0 0.0
          %2871 = vmatpush1.msra.mxu0 %v2774
          %2872 = vmatprep.subr.mxu0 0.0
          %2873 = vmatpush1.msra.mxu0 %v2775
          %2874 = vmatprep.subr.mxu0 0.0
          %2875 = vmatpush1.msra.mxu0 %v2776
          %2876 = vmatprep.subr.mxu0 0.0
          %2877 = vmatpush1.msra.mxu0 %v2777
          %2878 = vmatprep.subr.mxu0 0.0
          %2879 = vmatpush1.msra.mxu0 %v2778
          %2880 = vmatprep.subr.mxu0 0.0
          %2881 = vmatpush1.msra.mxu0 %v2779
          %2882 = vmatprep.subr.mxu0 0.0
          %2883 = vmatpush1.msra.mxu0 %v2780
          %2884 = vmatprep.mubr.f32.mxu0 %v2746
          %2885 = vmatmul.mubr.f32.gmra.mrb[0].mxu0 %v2745
          %v2886 = vpop.f32.mrb[0].mxu0
          %v2887 = vadd.f32 %v2818, %v2886
          %v2888 = vpop.f32.mrb[0].mxu0
          %2889 = vdwg.mxu0
          %2890 = vmatprep.subr.mxu0 0.0
          %2891 = vmatpush1.msra.mxu0 %v2781
          %2892 = vmatprep.subr.mxu0 0.0
          %2893 = vmatpush1.msra.mxu0 %v2782
          %2894 = vmatprep.subr.mxu0 0.0
          %2895 = vmatpush1.msra.mxu0 %v2783
          %2896 = vmatprep.subr.mxu0 0.0
          %2897 = vmatpush1.msra.mxu0 %v2784
          %2898 = vmatprep.subr.mxu0 0.0
          %2899 = vmatpush1.msra.mxu0 %v2785
          %2900 = vmatprep.subr.mxu0 0.0
          %2901 = vmatpush1.msra.mxu0 %v2786
          %2902 = vmatprep.subr.mxu0 0.0
          %2903 = vmatpush1.msra.mxu0 %v2787
          %2904 = vmatprep.subr.mxu0 0.0
          %2905 = vmatpush1.msra.mxu0 %v2788
          %2906 = vmatprep.subr.mxu0 0.0
          %2907 = vmatpush1.msra.mxu0 %v2789
          %2908 = vmatprep.subr.mxu0 0.0
          %2909 = vmatpush1.msra.mxu0 %v2790
          %2910 = vmatprep.subr.mxu0 0.0
          %2911 = vmatpush1.msra.mxu0 %v2791
          %2912 = vmatprep.subr.mxu0 0.0
          %2913 = vmatpush1.msra.mxu0 %v2792
          %2914 = vmatprep.subr.mxu0 0.0
          %2915 = vmatpush1.msra.mxu0 %v2793
          %2916 = vmatprep.subr.mxu0 0.0
          %2917 = vmatpush1.msra.mxu0 %v2794
          %2918 = vmatprep.subr.mxu0 0.0
          %2919 = vmatpush1.msra.mxu0 %v2795
          %2920 = vmatprep.subr.mxu0 0.0
          %2921 = vmatpush1.msra.mxu0 %v2796
          %2922 = vmatprep.subr.mxu0 0.0
          %2923 = vmatpush1.msra.mxu0 %v2797
          %2924 = vmatprep.subr.mxu0 0.0
          %2925 = vmatpush1.msra.mxu0 %v2798
          %2926 = vmatprep.subr.mxu0 0.0
          %2927 = vmatpush1.msra.mxu0 %v2799
          %2928 = vmatprep.subr.mxu0 0.0
          %2929 = vmatpush1.msra.mxu0 %v2800
          %2930 = vmatprep.subr.mxu0 0.0
          %2931 = vmatpush1.msra.mxu0 %v2801
          %2932 = vmatprep.subr.mxu0 0.0
          %2933 = vmatpush1.msra.mxu0 %v2802
          %2934 = vmatprep.subr.mxu0 0.0
          %2935 = vmatpush1.msra.mxu0 %v2803
          %2936 = vmatprep.subr.mxu0 0.0
          %2937 = vmatpush1.msra.mxu0 %v2804
          %2938 = vmatprep.subr.mxu0 0.0
          %2939 = vmatpush1.msra.mxu0 %v2805
          %2940 = vmatprep.subr.mxu0 0.0
          %2941 = vmatpush1.msra.mxu0 %v2806
          %2942 = vmatprep.subr.mxu0 0.0
          %2943 = vmatpush1.msra.mxu0 %v2807
          %2944 = vmatprep.subr.mxu0 0.0
          %2945 = vmatpush1.msra.mxu0 %v2808
          %2946 = vmatprep.subr.mxu0 0.0
          %2947 = vmatpush1.msra.mxu0 %v2809
          %2948 = vmatprep.subr.mxu0 0.0
          %2949 = vmatpush1.msra.mxu0 %v2810
          %2950 = vmatprep.subr.mxu0 0.0
          %2951 = vmatpush1.msra.mxu0 %v2811
          %2952 = vmatprep.subr.mxu0 0.0
          %2953 = vmatpush1.msra.mxu0 %v2812
          %2954 = vmatprep.mubr.f32.mxu0 %v2748
          %2955 = vmatmul.mubr.f32.gmra.mrb[0].mxu0 %v2747
          %v2956 = vpop.f32.mrb[0].mxu0
          %v2957 = vadd.f32 %v2887, %v2956
          %v2958 = vpop.f32.mrb[0].mxu0
          %2959 = vdwg.mxu0
          %vm2960 = vcmask 351232
          %2961 = vst.msk [vmem:[#allocation8] sm:$0xff] %vm2960, %v2957
        $region60: #{classifier_forward.1} parent=43 // pred_fallthru
          _
        // Predicated region
        $region61: #{classifier_forward.1} parent=43 // pred_check
          %p2962 = pneg %p171
        $region62: #{classifier_forward.1} parent=43 // pred_check_branch
          %2964 = sbr.rel (%p2962) target = $region64
        $region63: #{classifier_forward.1} parent=43 // pred_region
          %s2966 = ssub.s32 128, 128
          %2967 = vsyncadd [#allocation5], %s2966
          %s2969 = sshll.u32 [#allocation8], 4
          %s2970 = int_to_ptr.vmem [resolvable:$true] %s2969
          %2972 = dma.vmem_to_hbm [thread:$0]  %s2970, 128, %s6, [#allocation5]
        $region64: #{classifier_forward.1} parent=43 // pred_fallthru
          _
        // Predicated region
        $region65: #{classifier_forward.1} parent=43 // pred_check
          %p2973 = pneg %p171
        $region66: #{classifier_forward.1} parent=43 // pred_check_branch
          %2975 = sbr.rel (%p2973) target = $region68
        $region67: #{classifier_forward.1} parent=43 // pred_region
          %2976 = dma.done [#allocation5], 128
        $region68: #{classifier_forward.1} parent=43 // pred_fallthru
          _
      $region44: #{classifier_forward.1} parent=5 // pred_fallthru
        _
      %p2977 = scmp.le.s32.totalorder 2, %s17
      // Predicated region
      $region69: #{classifier_forward.1} parent=5 // pred_check
        %p2978 = pneg %p2977
      $region70: #{classifier_forward.1} parent=5 // pred_check_branch
        %2980 = sbr.rel (%p2978) target = $region72
      $region71: #{classifier_forward.1} parent=5 // pred_region
        %s2981 = ssub.s32 %s17, 2
      $region72: #{classifier_forward.1} parent=5 // pred_fallthru
        _
    $region6: #{classifier_forward.1} parent=1 // loop_footer
      %s21 = sadd.s32 1, %s17
    $region7: #{classifier_forward.1} parent=1 // loop_footer_branch
      %16 = sbr.rel target = $region3
    $region8: #{classifier_forward.1} parent=1 // loop_exit
      _
    %2982 = vsyncpa [#allocation4], 1
    %s2983 = scalar_lea.sflag [#allocation4], 1
    %2984 = vsyncpa %s2983, 1
    %2985 = vsyncpa [#allocation7], 1
    %2986 = vsyncpa [#allocation5], 1
    %s2987 = scalar_lea.sflag [#allocation5], 1
    %2988 = vsyncpa %s2987, 1

</llo_original>
